<compile_context>
chip_gen: v7x
topology: tpu7x:2x2x1
jax: 0.10.0
libtpu: 0.0.40
codegen_flags: <defaults>
</compile_context>

<pallas_src>
import jax
import jax.numpy as jnp
from jax.experimental import pallas as pl
from jax.experimental.pallas import tpu as pltpu


def _cross_stitch_kernel(alpha_ref, f1_ref, f2_ref, o1_ref, o2_ref):
    # alpha_ref: SMEM (2, 2) f32 scalars; f*/o*: VMEM (tb, lane) tiles.
    a00 = alpha_ref[0, 0]
    a01 = alpha_ref[0, 1]
    a10 = alpha_ref[1, 0]
    a11 = alpha_ref[1, 1]
    # Direct-from-ref expressions: the elementwise loop stays temp-free (no
    # full-tile VMEM temporaries at large tile sizes).
    o1_ref[...] = (a00 * f1_ref[...] + a01 * f2_ref[...]).astype(o1_ref.dtype)
    o2_ref[...] = (a10 * f1_ref[...] + a11 * f2_ref[...]).astype(o2_ref.dtype)


def _cross_stitch_xla(alpha, f1, f2):
    # Small-shape / irregular-shape fallback: let XLA fuse the elementwise mix.
    # alpha is f32 and the compute promotes to f32, matching the Pallas path.
    a = alpha.astype(jnp.float32)
    o1 = (a[0, 0] * f1 + a[0, 1] * f2).astype(f1.dtype)
    o2 = (a[1, 0] * f1 + a[1, 1] * f2).astype(f2.dtype)
    return o1, o2


def _vmem_limit_bytes():
    # Generation-aware scoped-VMEM limit: 75% of per-TC capacity. Conservative
    # fallback assumes v7x (64 MiB per TC) when the query is unavailable.
    try:
        cap = int(pltpu.get_tpu_info().vmem_capacity_bytes)
    except Exception:
        cap = 64 << 20
    return max(32 << 20, cap * 3 // 4)


def cross_stitch(alpha, f1, f2, *, block_bytes=4 << 20, min_pallas_bytes=1 << 20,
                 buffer_count=2, donate_inputs=False):
    """Apply a 2x2 cross-stitch unit to two equal-shaped feature tensors."""
    assert f1.shape == f2.shape and f1.dtype == f2.dtype
    orig_shape = f1.shape
    n = int(f1.size)
    itemsize = jnp.dtype(f1.dtype).itemsize

    # Pick the widest lane-dense last dim (multiple of 128) that divides n.
    lane = next((l for l in (1024, 512, 256, 128) if n % l == 0), None)

    # Tiny or lane-irregular inputs: Pallas launch/per-step overhead dominates,
    # or we cannot form lane-dense (multiple-of-128) stores - use fused XLA ops.
    if lane is None or n * itemsize < min_pallas_bytes:
        return _cross_stitch_xla(alpha, f1, f2)

    rows = n // lane

    # Dtype-native sublane multiple: 8 (f32) / 16 (bf16) / 32 (int8/fp8) so
    # packed rows stay unmasked at block boundaries.
    sub = max(8, 32 // itemsize)
    if rows < sub:  # defensive; cannot happen past the min_pallas_bytes gate
        return _cross_stitch_xla(alpha, f1, f2)

    # Generation-aware VMEM policy: cap effective per-input tile bytes so
    # 4 streams x buffer_count x tile + ~8 MiB margin fits the scoped limit.
    vmem_limit = _vmem_limit_bytes()
    per_stream_budget = max(1 << 20, (vmem_limit - (8 << 20)) // (4 * buffer_count))
    block_bytes_eff = min(block_bytes, per_stream_budget)

    # Target ~block_bytes_eff per input tile; tb a multiple of the sublane size.
    # A partial trailing block (rows % tb != 0) is handled by masked stores.
    target_tb = max(sub, (block_bytes_eff // (lane * itemsize)) // sub * sub)
    tb = max(sub, min(target_tb, (rows // sub) * sub))

    # Guarantee >= 4 grid steps whenever rows allow: on v7x the parallel grid
    # axis is sharded across 2 TensorCores, and >= 2 blocks per core keeps the
    # DMA/compute pipeline alive within each core.
    min_steps = 4
    if pl.cdiv(rows, tb) < min_steps and rows >= min_steps * sub:
        tb = max(sub, ((rows // min_steps) // sub) * sub)

    grid = (pl.cdiv(rows, tb),)

    f1_2d = f1.reshape(rows, lane)
    f2_2d = f2.reshape(rows, lane)

    spec_kwargs = {}
    if buffer_count != 2:
        # Optional deeper pipelining (e.g. 3 on v7x to keep more DMAs in
        # flight). Default 2 keeps the proven double-buffered configuration.
        spec_kwargs["pipeline_mode"] = pl.Buffered(buffer_count)
    feat_spec = pl.BlockSpec((tb, lane), lambda i: (i, 0), **spec_kwargs)
    alpha_spec = pl.BlockSpec(memory_space=pltpu.SMEM)

    out_shape = (
        jax.ShapeDtypeStruct((rows, lane), f1.dtype),
        jax.ShapeDtypeStruct((rows, lane), f2.dtype),
    )

    extra = {}
    if donate_inputs:
        # f1 -> out1, f2 -> out2. Safe only because every output block index
        # equals its input block index (identical index_map), so each block is
        # read before its slot is written back under the pipeline.
        extra["input_output_aliases"] = {1: 0, 2: 1}

    o1, o2 = pl.pallas_call(
        _cross_stitch_kernel,
        out_shape=out_shape,
        grid_spec=pltpu.PrefetchScalarGridSpec(
            num_scalar_prefetch=0,
            grid=grid,
            in_specs=[alpha_spec, feat_spec, feat_spec],
            out_specs=[feat_spec, feat_spec],
        ),
        compiler_params=pltpu.CompilerParams(
            dimension_semantics=("parallel",),
            vmem_limit_bytes=vmem_limit,
        ),
        **extra,
    )(alpha.astype(jnp.float32), f1_2d, f2_2d)

    return o1.reshape(orig_shape), o2.reshape(orig_shape)


def _reference(alpha, f1, f2):
    stacked = jnp.stack([f1, f2], axis=0)
    mixed = jnp.einsum("ij,jbd->ibd", alpha, stacked)
    return mixed[0], mixed[1]


if __name__ == "__main__":
    # Deterministic parameter init (matches nn.Parameter init in __init__).
    alpha = jnp.array([[0.7, 0.3], [0.3, 0.7]], dtype=jnp.float32)

    key = jax.random.PRNGKey(0)
    k1, k2, k3, k4 = jax.random.split(key, 4)

    # 1) Small shape (B=8, D=128): takes the fused-XLA fast path (kernel
    #    launch + per-step overhead would dominate at 4 KiB).
    B_s, D_s = 8, 128
    f1_s = jax.random.normal(k1, (B_s, D_s), dtype=jnp.float32)
    f2_s = jax.random.normal(k2, (B_s, D_s), dtype=jnp.float32)
    o1_s, o2_s = cross_stitch(alpha, f1_s, f2_s)
    o1_s = jax.block_until_ready(o1_s)
    o2_s = jax.block_until_ready(o2_s)
    r1_s, r2_s = _reference(alpha, f1_s, f2_s)
    assert jnp.allclose(o1_s, r1_s, atol=1e-5), "small out1 mismatch"
    assert jnp.allclose(o2_s, r2_s, atol=1e-5), "small out2 mismatch"

    # 2) Modest shape (B=1024, D=512, 2 MiB per tensor): exercises the Pallas
    #    path with lane-dense 1024-wide tiles and a >= 4-step pipelined grid.
    B, D = 1024, 512
    f1 = jax.random.normal(k3, (B, D), dtype=jnp.float32)
    f2 = jax.random.normal(k4, (B, D), dtype=jnp.float32)
    o1, o2 = cross_stitch(alpha, f1, f2)
    o1 = jax.block_until_ready(o1)
    o2 = jax.block_until_ready(o2)
    r1, r2 = _reference(alpha, f1, f2)
    assert jnp.allclose(o1, r1, atol=1e-5), "out1 mismatch"
    assert jnp.allclose(o2, r2, atol=1e-5), "out2 mismatch"

    print("KERNEL_OK")
</pallas_src>

<mosaic_0001>
module attributes {stable_mosaic.version = 11 : i64} {
  func.func @_cross_stitch_kernel(%arg0: i32, %arg1: memref<2x2xf32, #tpu.memory_space<smem>>, %arg2: memref<128x1024xf32, #tpu.memory_space<vmem>>, %arg3: memref<128x1024xf32, #tpu.memory_space<vmem>>, %arg4: memref<128x1024xf32, #tpu.memory_space<vmem>>, %arg5: memref<128x1024xf32, #tpu.memory_space<vmem>>) attributes {dimension_semantics = [#tpu.dimension_semantics<parallel>], iteration_bounds = array<i64: 4>, scalar_prefetch = 0 : i64, scratch_operands = 0 : i64, tpu.core_type = #tpu.core_type<tc>, window_params = [{transform_indices = @transform_0, window_bounds = array<i64: 2, 2>}, {transform_indices = @transform_1, window_bounds = array<i64: 128, 1024>}, {transform_indices = @transform_2, window_bounds = array<i64: 128, 1024>}, {transform_indices = @transform_3, window_bounds = array<i64: 128, 1024>}, {transform_indices = @transform_4, window_bounds = array<i64: 128, 1024>}]} {
    %c0 = arith.constant 0 : index
    %c0_0 = arith.constant 0 : index
    %0 = memref.load %arg1[%c0, %c0_0] : memref<2x2xf32, #tpu.memory_space<smem>>
    %c0_1 = arith.constant 0 : index
    %c1 = arith.constant 1 : index
    %1 = memref.load %arg1[%c0_1, %c1] : memref<2x2xf32, #tpu.memory_space<smem>>
    %c1_2 = arith.constant 1 : index
    %c0_3 = arith.constant 0 : index
    %2 = memref.load %arg1[%c1_2, %c0_3] : memref<2x2xf32, #tpu.memory_space<smem>>
    %c1_4 = arith.constant 1 : index
    %c1_5 = arith.constant 1 : index
    %3 = memref.load %arg1[%c1_4, %c1_5] : memref<2x2xf32, #tpu.memory_space<smem>>
    %c0_6 = arith.constant 0 : index
    %c0_7 = arith.constant 0 : index
    %4 = vector.load %arg2[%c0_6, %c0_7] : memref<128x1024xf32, #tpu.memory_space<vmem>>, vector<128x1024xf32>
    %5 = vector.broadcast %0 : f32 to vector<128x1024xf32>
    %6 = arith.mulf %5, %4 : vector<128x1024xf32>
    %c0_8 = arith.constant 0 : index
    %c0_9 = arith.constant 0 : index
    %7 = vector.load %arg3[%c0_8, %c0_9] : memref<128x1024xf32, #tpu.memory_space<vmem>>, vector<128x1024xf32>
    %8 = vector.broadcast %1 : f32 to vector<128x1024xf32>
    %9 = arith.mulf %8, %7 : vector<128x1024xf32>
    %10 = arith.addf %6, %9 : vector<128x1024xf32>
    %c0_10 = arith.constant 0 : index
    %c0_11 = arith.constant 0 : index
    %11 = vector.load %arg4[%c0_10, %c0_11] : memref<128x1024xf32, #tpu.memory_space<vmem>>, vector<128x1024xf32>
    tpu.vector_store %arg4[%c0_10, %c0_11], %10 {strides = array<i32>} : memref<128x1024xf32, #tpu.memory_space<vmem>>, vector<128x1024xf32>,
    %c0_12 = arith.constant 0 : index
    %c0_13 = arith.constant 0 : index
    %12 = vector.load %arg2[%c0_12, %c0_13] : memref<128x1024xf32, #tpu.memory_space<vmem>>, vector<128x1024xf32>
    %13 = vector.broadcast %2 : f32 to vector<128x1024xf32>
    %14 = arith.mulf %13, %12 : vector<128x1024xf32>
    %c0_14 = arith.constant 0 : index
    %c0_15 = arith.constant 0 : index
    %15 = vector.load %arg3[%c0_14, %c0_15] : memref<128x1024xf32, #tpu.memory_space<vmem>>, vector<128x1024xf32>
    %16 = vector.broadcast %3 : f32 to vector<128x1024xf32>
    %17 = arith.mulf %16, %15 : vector<128x1024xf32>
    %18 = arith.addf %14, %17 : vector<128x1024xf32>
    %c0_16 = arith.constant 0 : index
    %c0_17 = arith.constant 0 : index
    %19 = vector.load %arg5[%c0_16, %c0_17] : memref<128x1024xf32, #tpu.memory_space<vmem>>, vector<128x1024xf32>
    tpu.vector_store %arg5[%c0_16, %c0_17], %18 {strides = array<i32>} : memref<128x1024xf32, #tpu.memory_space<vmem>>, vector<128x1024xf32>,
    return
  }
  func.func @transform_0(%arg0: i32) -> (i32, i32) {
    %c0_i32 = arith.constant 0 : i32
    %c0_i32_0 = arith.constant 0 : i32
    %c0_i32_1 = arith.constant 0 : i32
    return %c0_i32, %c0_i32_0 : i32, i32
  }
  func.func @transform_1(%arg0: i32) -> (i32, i32) {
    %c0_i32 = arith.constant 0 : i32
    %c0_i32_0 = arith.constant 0 : i32
    return %arg0, %c0_i32 : i32, i32
  }
  func.func @transform_2(%arg0: i32) -> (i32, i32) {
    %c0_i32 = arith.constant 0 : i32
    %c0_i32_0 = arith.constant 0 : i32
    return %arg0, %c0_i32 : i32, i32
  }
  func.func @transform_3(%arg0: i32) -> (i32, i32) {
    %c0_i32 = arith.constant 0 : i32
    %c0_i32_0 = arith.constant 0 : i32
    return %arg0, %c0_i32 : i32, i32
  }
  func.func @transform_4(%arg0: i32) -> (i32, i32) {
    %c0_i32 = arith.constant 0 : i32
    %c0_i32_0 = arith.constant 0 : i32
    return %arg0, %c0_i32 : i32, i32
  }
}

</mosaic_0001>

<llo_original>
// kernel: tpu_custom_call.1
$region0: #{tpu_custom_call.1}
  #allocation0 [shape = 'u32[]', space=smem, size = 0x4, offset = 0x4, fixed_abs, tag = 'smem constant byte address 0x4 - core index']
  #allocation1 [shape = 'u32[144,128]{1,0:T(1,128)}', space=vmem, size = 0x12000, scoped, tag = 'internal scratch']
  %s0 = inlined_call_operand.hbm [shape: f32[2,2], index: 0, kind: input, shape index: {}]
  %s1 = inlined_call_operand.hbm [shape: f32[512,1024], index: 1, kind: input, shape index: {}]
  %s2 = inlined_call_operand.hbm [shape: f32[512,1024], index: 2, kind: input, shape index: {}]
  %s3 = inlined_call_operand.hbm [shape: f32[512,1024], index: 3, kind: output, shape index: {0}]
  %s4 = inlined_call_operand.hbm [shape: f32[512,1024], index: 4, kind: output, shape index: {1}]
  %5 = xla_tuple %s3, %s4
  %s6 = sld [smem:[#allocation0]]
  $region65: #{tpu_custom_call.1} parent=0
    _
  %s8 = ssub.s32 1, %s6
  %s9 = scalar_select 0, %s8, %s6
  $region1: #{tpu_custom_call.1} parent=0
    #allocation2 [shape = 'u8[1024]{0}', space=smem, size = 0x400, scoped, tag = 'input window, operand 0, single buffered']
    #allocation3 [shape = 's32[2]{0}', space=sflag, size = 0x8, scoped, tag = 'scoped memory for tpu_custom_call.1']
    #allocation4 [shape = 's32[2]{0}', space=sflag, size = 0x8, scoped, tag = 'scoped memory for tpu_custom_call.1']
    #allocation5 [shape = 's32[2]{0}', space=sflag, size = 0x8, scoped, tag = 'scoped memory for tpu_custom_call.1']
    #allocation6 [shape = 'u8[1048576]{0}', space=vmem, size = 0x100000, scoped, tag = 'input window, operand 1']
    #allocation7 [shape = 'u8[1048576]{0}', space=vmem, size = 0x100000, scoped, tag = 'input window, operand 2']
    #allocation8 [shape = 's32[2]{0}', space=sflag, size = 0x8, scoped, tag = 'scoped memory for tpu_custom_call.1']
    #allocation9 [shape = 'u8[1048576]{0}', space=vmem, size = 0x100000, scoped, tag = 'output window, operand 0']
    #allocation10 [shape = 'u8[1048576]{0}', space=vmem, size = 0x100000, scoped, tag = 'output window, operand 1']
    #allocation11 [shape = 's32[2]{0}', space=sflag, size = 0x8, scoped, tag = 'scoped memory for tpu_custom_call.1']
    %10 = vsyncpa [#allocation5], 0
    %11 = vsyncpa [#allocation3], 0
    %s12 = scalar_lea.sflag [#allocation3], 1
    %13 = vsyncpa %s12, 0
    %14 = vsyncpa [#allocation8], 0
    %s15 = scalar_lea.sflag [#allocation8], 1
    %16 = vsyncpa %s15, 0
    %17 = vsyncpa [#allocation4], 0
    %s18 = scalar_lea.sflag [#allocation4], 1
    %19 = vsyncpa %s18, 0
    %20 = vsyncpa [#allocation11], 0
    %s21 = scalar_lea.sflag [#allocation11], 1
    %22 = vsyncpa %s21, 0
    loop: start=0, step=1, limit=6
    $region2: #{tpu_custom_call.1} parent=1 // loop_pre_header
      _
    $region3: #{tpu_custom_call.1} parent=1 // loop_header
      %s24 = sphi 0, %s28
      %p25 = scmp.ge.s32.totalorder %s24, 6
      %s32 = sphi 0, %s32
      %s34 = sphi 0, %s32
      %s35 = sphi 0, %s34
      %s49 = sphi 0, %s35
      %s55 = sphi 0, %s57
      %s58 = sphi 0, %s55
      %s59 = sphi 0, %s58
      %s75 = sphi 0, %s59
      %s81 = sphi 0, %s83
      %s84 = sphi 0, %s81
      %s85 = sphi 0, %s84
      %s101 = sphi 0, %s85
      %s107 = sphi 0, %s109
      %s110 = sphi 0, %s107
      %s111 = sphi 0, %s110
      %s127 = sphi 0, %s111
      %s133 = sphi 0, %s135
      %s136 = sphi 0, %s133
      %s137 = sphi 0, %s136
      %s153 = sphi 0, %s137
    $region4: #{tpu_custom_call.1} parent=1 // loop_header_branch
      %27 = sbr.rel (%p25) target = $region8
    $region5: #{tpu_custom_call.1} parent=1 // loop_body
      %s29 = ssub.s32 %s24, 1
      %s30 = ssub.s32 %s24, 2
      %s31 = sadd.s32 %s24, 1
      %s33 = sadd.s32 %s32, 1
      %p36 = scmp.eq.s32.totalorder %s24, 3
      %p37 = scmp.ne.s32.totalorder %s32, %s34
      %p38 = scmp.eq.s32.totalorder %s24, 0
      %p39 = por %p37, %p38
      %p40 = scmp.ne.s32.totalorder %s32, %s34
      %p41 = scmp.eq.s32.totalorder %s29, 3
      %p42 = por %p40, %p41
      %p43 = scmp.ne.s32.totalorder %s34, %s35
      %p44 = scmp.eq.s32.totalorder %s29, 0
      %p45 = por %p43, %p44
      %p46 = scmp.ne.s32.totalorder %s34, %s35
      %p47 = scmp.eq.s32.totalorder %s30, 3
      %p48 = por %p46, %p47
      %p50 = scmp.ne.s32.totalorder %s35, %s49
      %p51 = scmp.eq.s32.totalorder %s30, 0
      %p52 = por %p50, %p51
      %s53 = ssub.s32 %s24, %s31
      %p54 = scmp.eq.s32.totalorder %s53, 0
      %s56 = sadd.s32 %s55, 1
      %s57 = scalar_select %p54, %s55, %s56
      %p60 = pneg %p54
      %p61 = scmp.eq.s32.totalorder %s24, 3
      %p62 = por %p60, %p61
      %p63 = scmp.ne.s32.totalorder %s55, %s58
      %p64 = scmp.eq.s32.totalorder %s24, 0
      %p65 = por %p63, %p64
      %p66 = scmp.ne.s32.totalorder %s55, %s58
      %p67 = scmp.eq.s32.totalorder %s29, 3
      %p68 = por %p66, %p67
      %p69 = scmp.ne.s32.totalorder %s58, %s59
      %p70 = scmp.eq.s32.totalorder %s29, 0
      %p71 = por %p69, %p70
      %p72 = scmp.ne.s32.totalorder %s58, %s59
      %p73 = scmp.eq.s32.totalorder %s30, 3
      %p74 = por %p72, %p73
      %p76 = scmp.ne.s32.totalorder %s59, %s75
      %p77 = scmp.eq.s32.totalorder %s30, 0
      %p78 = por %p76, %p77
      %s79 = ssub.s32 %s24, %s31
      %p80 = scmp.eq.s32.totalorder %s79, 0
      %s82 = sadd.s32 %s81, 1
      %s83 = scalar_select %p80, %s81, %s82
      %p86 = pneg %p80
      %p87 = scmp.eq.s32.totalorder %s24, 3
      %p88 = por %p86, %p87
      %p89 = scmp.ne.s32.totalorder %s81, %s84
      %p90 = scmp.eq.s32.totalorder %s24, 0
      %p91 = por %p89, %p90
      %p92 = scmp.ne.s32.totalorder %s81, %s84
      %p93 = scmp.eq.s32.totalorder %s29, 3
      %p94 = por %p92, %p93
      %p95 = scmp.ne.s32.totalorder %s84, %s85
      %p96 = scmp.eq.s32.totalorder %s29, 0
      %p97 = por %p95, %p96
      %p98 = scmp.ne.s32.totalorder %s84, %s85
      %p99 = scmp.eq.s32.totalorder %s30, 3
      %p100 = por %p98, %p99
      %p102 = scmp.ne.s32.totalorder %s85, %s101
      %p103 = scmp.eq.s32.totalorder %s30, 0
      %p104 = por %p102, %p103
      %s105 = ssub.s32 %s24, %s31
      %p106 = scmp.eq.s32.totalorder %s105, 0
      %s108 = sadd.s32 %s107, 1
      %s109 = scalar_select %p106, %s107, %s108
      %p112 = pneg %p106
      %p113 = scmp.eq.s32.totalorder %s24, 3
      %p114 = por %p112, %p113
      %p115 = scmp.ne.s32.totalorder %s107, %s110
      %p116 = scmp.eq.s32.totalorder %s24, 0
      %p117 = por %p115, %p116
      %p118 = scmp.ne.s32.totalorder %s107, %s110
      %p119 = scmp.eq.s32.totalorder %s29, 3
      %p120 = por %p118, %p119
      %p121 = scmp.ne.s32.totalorder %s110, %s111
      %p122 = scmp.eq.s32.totalorder %s29, 0
      %p123 = por %p121, %p122
      %p124 = scmp.ne.s32.totalorder %s110, %s111
      %p125 = scmp.eq.s32.totalorder %s30, 3
      %p126 = por %p124, %p125
      %p128 = scmp.ne.s32.totalorder %s111, %s127
      %p129 = scmp.eq.s32.totalorder %s30, 0
      %p130 = por %p128, %p129
      %s131 = ssub.s32 %s24, %s31
      %p132 = scmp.eq.s32.totalorder %s131, 0
      %s134 = sadd.s32 %s133, 1
      %s135 = scalar_select %p132, %s133, %s134
      %p138 = pneg %p132
      %p139 = scmp.eq.s32.totalorder %s24, 3
      %p140 = por %p138, %p139
      %p141 = scmp.ne.s32.totalorder %s133, %s136
      %p142 = scmp.eq.s32.totalorder %s24, 0
      %p143 = por %p141, %p142
      %p144 = scmp.ne.s32.totalorder %s133, %s136
      %p145 = scmp.eq.s32.totalorder %s29, 3
      %p146 = por %p144, %p145
      %p147 = scmp.ne.s32.totalorder %s136, %s137
      %p148 = scmp.eq.s32.totalorder %s29, 0
      %p149 = por %p147, %p148
      %p150 = scmp.ne.s32.totalorder %s136, %s137
      %p151 = scmp.eq.s32.totalorder %s30, 3
      %p152 = por %p150, %p151
      %p154 = scmp.ne.s32.totalorder %s137, %s153
      %p155 = scmp.eq.s32.totalorder %s30, 0
      %p156 = por %p154, %p155
      %p157 = scmp.le.s32.totalorder 1, %s24
      %p158 = scmp.lt.s32.totalorder %s24, 5
      %p159 = pnand %p157, %p158
      %p160 = pneg %p159
      // Predicated region
      $region9: #{tpu_custom_call.1} parent=5 // pred_check
        _
      $region10: #{tpu_custom_call.1} parent=5 // pred_check_branch
        %162 = sbr.rel (%p159) target = $region12
      $region11: #{tpu_custom_call.1} parent=5 // pred_region
        %s163 = ssub.s32 %s24, 1
        // Predicated region
        $region13: #{tpu_custom_call.1} parent=11 // pred_check
          %p164 = pneg %p45
        $region14: #{tpu_custom_call.1} parent=11 // pred_check_branch
          %166 = sbr.rel (%p164) target = $region16
        $region15: #{tpu_custom_call.1} parent=11 // pred_region
          %s168 = ssub.s32 32, 32
          %169 = vsyncadd [#allocation5], %s168
          %172 = dma.hbm_to_smem %s0, 32, [#allocation2], [#allocation5]
        $region16: #{tpu_custom_call.1} parent=11 // pred_fallthru
          _
      $region12: #{tpu_custom_call.1} parent=5 // pred_fallthru
        _
      %p173 = scmp.lt.s32.totalorder %s24, 4
      // Predicated region
      $region17: #{tpu_custom_call.1} parent=5 // pred_check
        %p174 = pneg %p173
      $region18: #{tpu_custom_call.1} parent=5 // pred_check_branch
        %176 = sbr.rel (%p174) target = $region20
      $region19: #{tpu_custom_call.1} parent=5 // pred_region
        // Predicated region
        $region21: #{tpu_custom_call.1} parent=19 // pred_check
          %p177 = pneg %p65
        $region22: #{tpu_custom_call.1} parent=19 // pred_check_branch
          %179 = sbr.rel (%p177) target = $region24
        $region23: #{tpu_custom_call.1} parent=19 // pred_region
          %s180 = sand.u32 %s55, 1
          %s181 = scalar_lea.sflag [#allocation3], %s180
          %s182 = sand.u32 %s55, 1
          %s183 = smul.addr %s182, 1024
          %s184 = scalar_lea.vmem [#allocation6], %s183
          %s185 = smul.u32 16, %s24
          %s187 = ssub.s32 16384, 16384
          %188 = vsyncadd %s181, %s187
          %s189 = smul.addr %s185, 8
          %s190 = smul.addr %s189, 128
          %s191 = scalar_lea.hbm %s1, %s190
          %s192 = sshll.u32 %s184, 4
          %s193 = int_to_ptr.vmem [resolvable:$true] %s192
          %198 = dma.hbm_to_vmem [thread:$0]  %s191, 16384, %s193, %s181, 1024, 1024, 64
        $region24: #{tpu_custom_call.1} parent=19 // pred_fallthru
          _
        // Predicated region
        $region25: #{tpu_custom_call.1} parent=19 // pred_check
          %p199 = pneg %p91
        $region26: #{tpu_custom_call.1} parent=19 // pred_check_branch
          %201 = sbr.rel (%p199) target = $region28
        $region27: #{tpu_custom_call.1} parent=19 // pred_region
          %s202 = sand.u32 %s81, 1
          %s203 = scalar_lea.sflag [#allocation8], %s202
          %s204 = sand.u32 %s81, 1
          %s205 = smul.addr %s204, 1024
          %s206 = scalar_lea.vmem [#allocation7], %s205
          %s207 = smul.u32 16, %s24
          %s209 = ssub.s32 16384, 16384
          %210 = vsyncadd %s203, %s209
          %s211 = smul.addr %s207, 8
          %s212 = smul.addr %s211, 128
          %s213 = scalar_lea.hbm %s2, %s212
          %s214 = sshll.u32 %s206, 4
          %s215 = int_to_ptr.vmem [resolvable:$true] %s214
          %220 = dma.hbm_to_vmem [thread:$0]  %s213, 16384, %s215, %s203, 1024, 1024, 64
        $region28: #{tpu_custom_call.1} parent=19 // pred_fallthru
          _
      $region20: #{tpu_custom_call.1} parent=5 // pred_fallthru
        _
      %p221 = scmp.le.s32.totalorder 1, %s24
      %p222 = scmp.lt.s32.totalorder %s24, 5
      %p223 = pnand %p221, %p222
      %p224 = pneg %p223
      // Predicated region
      $region29: #{tpu_custom_call.1} parent=5 // pred_check
        _
      $region30: #{tpu_custom_call.1} parent=5 // pred_check_branch
        %226 = sbr.rel (%p223) target = $region32
      $region31: #{tpu_custom_call.1} parent=5 // pred_region
        %s227 = ssub.s32 %s24, 1
        // Predicated region
        $region33: #{tpu_custom_call.1} parent=31 // pred_check
          %p228 = pneg %p45
        $region34: #{tpu_custom_call.1} parent=31 // pred_check_branch
          %230 = sbr.rel (%p228) target = $region36
        $region35: #{tpu_custom_call.1} parent=31 // pred_region
          %231 = dma.done [#allocation5], 32
        $region36: #{tpu_custom_call.1} parent=31 // pred_fallthru
          _
        %s232 = sand.u32 %s58, 1
        %s233 = scalar_lea.sflag [#allocation3], %s232
        %s234 = sand.u32 %s58, 1
        %s235 = smul.addr %s234, 1024
        %s236 = scalar_lea.vmem [#allocation6], %s235
        // Predicated region
        $region37: #{tpu_custom_call.1} parent=31 // pred_check
          %p237 = pneg %p71
        $region38: #{tpu_custom_call.1} parent=31 // pred_check_branch
          %239 = sbr.rel (%p237) target = $region40
        $region39: #{tpu_custom_call.1} parent=31 // pred_region
          %240 = dma.done %s233, 16384
        $region40: #{tpu_custom_call.1} parent=31 // pred_fallthru
          _
        %s241 = sand.u32 %s84, 1
        %s242 = scalar_lea.sflag [#allocation8], %s241
        %s243 = sand.u32 %s84, 1
        %s244 = smul.addr %s243, 1024
        %s245 = scalar_lea.vmem [#allocation7], %s244
        // Predicated region
        $region41: #{tpu_custom_call.1} parent=31 // pred_check
          %p246 = pneg %p97
        $region42: #{tpu_custom_call.1} parent=31 // pred_check_branch
          %248 = sbr.rel (%p246) target = $region44
        $region43: #{tpu_custom_call.1} parent=31 // pred_region
          %249 = dma.done %s242, 16384
        $region44: #{tpu_custom_call.1} parent=31 // pred_fallthru
          _
        %250 = sfence
        %p251 = pneg %p45
        %p252 = pneg %p42
        %s253 = sand.u32 %s58, 1
        %s254 = scalar_lea.sflag [#allocation3], %s253
        %s255 = sand.u32 %s58, 1
        %s256 = smul.addr %s255, 1024
        %s257 = scalar_lea.vmem [#allocation6], %s256
        %p258 = pneg %p71
        %p259 = pneg %p68
        %s260 = sand.u32 %s84, 1
        %s261 = scalar_lea.sflag [#allocation8], %s260
        %s262 = sand.u32 %s84, 1
        %s263 = smul.addr %s262, 1024
        %s264 = scalar_lea.vmem [#allocation7], %s263
        %p265 = pneg %p97
        %p266 = pneg %p94
        %p267 = pneg %p123
        %p268 = pneg %p120
        %s269 = sand.u32 %s110, 1
        %s270 = scalar_lea.sflag [#allocation4], %s269
        %s271 = sand.u32 %s110, 1
        %s272 = smul.addr %s271, 1024
        %s273 = scalar_lea.vmem [#allocation9], %s272
        %p274 = pneg %p149
        %p275 = pneg %p146
        %s276 = sand.u32 %s136, 1
        %s277 = scalar_lea.sflag [#allocation11], %s276
        %s278 = sand.u32 %s136, 1
        %s279 = smul.addr %s278, 1024
        %s280 = scalar_lea.vmem [#allocation10], %s279
        %s281 = smul.u32 16, %s29
        %s282 = smul.u32 16, %s29
        %s283 = smul.u32 16, %s29
        %s284 = smul.u32 16, %s29
        %s285 = sld [smem:[#allocation2]]
        %s286 = sld [smem:[#allocation2 + $0x1]]
        %s287 = sld [smem:[#allocation2 + $0x80]]
        %s288 = sld [smem:[#allocation2 + $0x81]]
        %v289 = vld [vmem:[%s236] sm:$0xff]
        %v290 = vld [vmem:[%s236 + $0x8] sm:$0xff]
        %v291 = vld [vmem:[%s236 + $0x10] sm:$0xff]
        %v292 = vld [vmem:[%s236 + $0x18] sm:$0xff]
        %v293 = vld [vmem:[%s236 + $0x20] sm:$0xff]
        %v294 = vld [vmem:[%s236 + $0x28] sm:$0xff]
        %v295 = vld [vmem:[%s236 + $0x30] sm:$0xff]
        %v296 = vld [vmem:[%s236 + $0x38] sm:$0xff]
        %v297 = vld [vmem:[%s236 + $0x40] sm:$0xff]
        %v298 = vld [vmem:[%s236 + $0x48] sm:$0xff]
        %v299 = vld [vmem:[%s236 + $0x50] sm:$0xff]
        %v300 = vld [vmem:[%s236 + $0x58] sm:$0xff]
        %v301 = vld [vmem:[%s236 + $0x60] sm:$0xff]
        %v302 = vld [vmem:[%s236 + $0x68] sm:$0xff]
        %v303 = vld [vmem:[%s236 + $0x70] sm:$0xff]
        %v304 = vld [vmem:[%s236 + $0x78] sm:$0xff]
        %v305 = vld [vmem:[%s236 + $0x80] sm:$0xff]
        %v306 = vld [vmem:[%s236 + $0x88] sm:$0xff]
        %v307 = vld [vmem:[%s236 + $0x90] sm:$0xff]
        %v308 = vld [vmem:[%s236 + $0x98] sm:$0xff]
        %v309 = vld [vmem:[%s236 + $0xa0] sm:$0xff]
        %v310 = vld [vmem:[%s236 + $0xa8] sm:$0xff]
        %v311 = vld [vmem:[%s236 + $0xb0] sm:$0xff]
        %v312 = vld [vmem:[%s236 + $0xb8] sm:$0xff]
        %v313 = vld [vmem:[%s236 + $0xc0] sm:$0xff]
        %v314 = vld [vmem:[%s236 + $0xc8] sm:$0xff]
        %v315 = vld [vmem:[%s236 + $0xd0] sm:$0xff]
        %v316 = vld [vmem:[%s236 + $0xd8] sm:$0xff]
        %v317 = vld [vmem:[%s236 + $0xe0] sm:$0xff]
        %v318 = vld [vmem:[%s236 + $0xe8] sm:$0xff]
        %v319 = vld [vmem:[%s236 + $0xf0] sm:$0xff]
        %v320 = vld [vmem:[%s236 + $0xf8] sm:$0xff]
        %v321 = vld [vmem:[%s236 + $0x100] sm:$0xff]
        %v322 = vld [vmem:[%s236 + $0x108] sm:$0xff]
        %v323 = vld [vmem:[%s236 + $0x110] sm:$0xff]
        %v324 = vld [vmem:[%s236 + $0x118] sm:$0xff]
        %v325 = vld [vmem:[%s236 + $0x120] sm:$0xff]
        %v326 = vld [vmem:[%s236 + $0x128] sm:$0xff]
        %v327 = vld [vmem:[%s236 + $0x130] sm:$0xff]
        %v328 = vld [vmem:[%s236 + $0x138] sm:$0xff]
        %v329 = vld [vmem:[%s236 + $0x140] sm:$0xff]
        %v330 = vld [vmem:[%s236 + $0x148] sm:$0xff]
        %v331 = vld [vmem:[%s236 + $0x150] sm:$0xff]
        %v332 = vld [vmem:[%s236 + $0x158] sm:$0xff]
        %v333 = vld [vmem:[%s236 + $0x160] sm:$0xff]
        %v334 = vld [vmem:[%s236 + $0x168] sm:$0xff]
        %v335 = vld [vmem:[%s236 + $0x170] sm:$0xff]
        %v336 = vld [vmem:[%s236 + $0x178] sm:$0xff]
        %v337 = vld [vmem:[%s236 + $0x180] sm:$0xff]
        %v338 = vld [vmem:[%s236 + $0x188] sm:$0xff]
        %v339 = vld [vmem:[%s236 + $0x190] sm:$0xff]
        %v340 = vld [vmem:[%s236 + $0x198] sm:$0xff]
        %v341 = vld [vmem:[%s236 + $0x1a0] sm:$0xff]
        %v342 = vld [vmem:[%s236 + $0x1a8] sm:$0xff]
        %v343 = vld [vmem:[%s236 + $0x1b0] sm:$0xff]
        %v344 = vld [vmem:[%s236 + $0x1b8] sm:$0xff]
        %v345 = vld [vmem:[%s236 + $0x1c0] sm:$0xff]
        %v346 = vld [vmem:[%s236 + $0x1c8] sm:$0xff]
        %v347 = vld [vmem:[%s236 + $0x1d0] sm:$0xff]
        %v348 = vld [vmem:[%s236 + $0x1d8] sm:$0xff]
        %v349 = vld [vmem:[%s236 + $0x1e0] sm:$0xff]
        %v350 = vld [vmem:[%s236 + $0x1e8] sm:$0xff]
        %v351 = vld [vmem:[%s236 + $0x1f0] sm:$0xff]
        %v352 = vld [vmem:[%s236 + $0x1f8] sm:$0xff]
        %v353 = vld [vmem:[%s236 + $0x200] sm:$0xff]
        %v354 = vld [vmem:[%s236 + $0x208] sm:$0xff]
        %v355 = vld [vmem:[%s236 + $0x210] sm:$0xff]
        %v356 = vld [vmem:[%s236 + $0x218] sm:$0xff]
        %v357 = vld [vmem:[%s236 + $0x220] sm:$0xff]
        %v358 = vld [vmem:[%s236 + $0x228] sm:$0xff]
        %v359 = vld [vmem:[%s236 + $0x230] sm:$0xff]
        %v360 = vld [vmem:[%s236 + $0x238] sm:$0xff]
        %v361 = vld [vmem:[%s236 + $0x240] sm:$0xff]
        %v362 = vld [vmem:[%s236 + $0x248] sm:$0xff]
        %v363 = vld [vmem:[%s236 + $0x250] sm:$0xff]
        %v364 = vld [vmem:[%s236 + $0x258] sm:$0xff]
        %v365 = vld [vmem:[%s236 + $0x260] sm:$0xff]
        %v366 = vld [vmem:[%s236 + $0x268] sm:$0xff]
        %v367 = vld [vmem:[%s236 + $0x270] sm:$0xff]
        %v368 = vld [vmem:[%s236 + $0x278] sm:$0xff]
        %v369 = vld [vmem:[%s236 + $0x280] sm:$0xff]
        %v370 = vld [vmem:[%s236 + $0x288] sm:$0xff]
        %v371 = vld [vmem:[%s236 + $0x290] sm:$0xff]
        %v372 = vld [vmem:[%s236 + $0x298] sm:$0xff]
        %v373 = vld [vmem:[%s236 + $0x2a0] sm:$0xff]
        %v374 = vld [vmem:[%s236 + $0x2a8] sm:$0xff]
        %v375 = vld [vmem:[%s236 + $0x2b0] sm:$0xff]
        %v376 = vld [vmem:[%s236 + $0x2b8] sm:$0xff]
        %v377 = vld [vmem:[%s236 + $0x2c0] sm:$0xff]
        %v378 = vld [vmem:[%s236 + $0x2c8] sm:$0xff]
        %v379 = vld [vmem:[%s236 + $0x2d0] sm:$0xff]
        %v380 = vld [vmem:[%s236 + $0x2d8] sm:$0xff]
        %v381 = vld [vmem:[%s236 + $0x2e0] sm:$0xff]
        %v382 = vld [vmem:[%s236 + $0x2e8] sm:$0xff]
        %v383 = vld [vmem:[%s236 + $0x2f0] sm:$0xff]
        %v384 = vld [vmem:[%s236 + $0x2f8] sm:$0xff]
        %v385 = vld [vmem:[%s236 + $0x300] sm:$0xff]
        %v386 = vld [vmem:[%s236 + $0x308] sm:$0xff]
        %v387 = vld [vmem:[%s236 + $0x310] sm:$0xff]
        %v388 = vld [vmem:[%s236 + $0x318] sm:$0xff]
        %v389 = vld [vmem:[%s236 + $0x320] sm:$0xff]
        %v390 = vld [vmem:[%s236 + $0x328] sm:$0xff]
        %v391 = vld [vmem:[%s236 + $0x330] sm:$0xff]
        %v392 = vld [vmem:[%s236 + $0x338] sm:$0xff]
        %v393 = vld [vmem:[%s236 + $0x340] sm:$0xff]
        %v394 = vld [vmem:[%s236 + $0x348] sm:$0xff]
        %v395 = vld [vmem:[%s236 + $0x350] sm:$0xff]
        %v396 = vld [vmem:[%s236 + $0x358] sm:$0xff]
        %v397 = vld [vmem:[%s236 + $0x360] sm:$0xff]
        %v398 = vld [vmem:[%s236 + $0x368] sm:$0xff]
        %v399 = vld [vmem:[%s236 + $0x370] sm:$0xff]
        %v400 = vld [vmem:[%s236 + $0x378] sm:$0xff]
        %v401 = vld [vmem:[%s236 + $0x380] sm:$0xff]
        %v402 = vld [vmem:[%s236 + $0x388] sm:$0xff]
        %v403 = vld [vmem:[%s236 + $0x390] sm:$0xff]
        %v404 = vld [vmem:[%s236 + $0x398] sm:$0xff]
        %v405 = vld [vmem:[%s236 + $0x3a0] sm:$0xff]
        %v406 = vld [vmem:[%s236 + $0x3a8] sm:$0xff]
        %v407 = vld [vmem:[%s236 + $0x3b0] sm:$0xff]
        %v408 = vld [vmem:[%s236 + $0x3b8] sm:$0xff]
        %v409 = vld [vmem:[%s236 + $0x3c0] sm:$0xff]
        %v410 = vld [vmem:[%s236 + $0x3c8] sm:$0xff]
        %v411 = vld [vmem:[%s236 + $0x3d0] sm:$0xff]
        %v412 = vld [vmem:[%s236 + $0x3d8] sm:$0xff]
        %v413 = vld [vmem:[%s236 + $0x3e0] sm:$0xff]
        %v414 = vld [vmem:[%s236 + $0x3e8] sm:$0xff]
        %v415 = vld [vmem:[%s236 + $0x3f0] sm:$0xff]
        %v416 = vld [vmem:[%s236 + $0x3f8] sm:$0xff]
        %v417 = vstv %s285
        %v418 = vmul.f32 %v417, %v289
        %v419 = vmul.f32 %v417, %v290
        %v420 = vmul.f32 %v417, %v291
        %v421 = vmul.f32 %v417, %v292
        %v422 = vmul.f32 %v417, %v293
        %v423 = vmul.f32 %v417, %v294
        %v424 = vmul.f32 %v417, %v295
        %v425 = vmul.f32 %v417, %v296
        %v426 = vmul.f32 %v417, %v297
        %v427 = vmul.f32 %v417, %v298
        %v428 = vmul.f32 %v417, %v299
        %v429 = vmul.f32 %v417, %v300
        %v430 = vmul.f32 %v417, %v301
        %v431 = vmul.f32 %v417, %v302
        %v432 = vmul.f32 %v417, %v303
        %v433 = vmul.f32 %v417, %v304
        %v434 = vmul.f32 %v417, %v305
        %v435 = vmul.f32 %v417, %v306
        %v436 = vmul.f32 %v417, %v307
        %v437 = vmul.f32 %v417, %v308
        %v438 = vmul.f32 %v417, %v309
        %v439 = vmul.f32 %v417, %v310
        %v440 = vmul.f32 %v417, %v311
        %v441 = vmul.f32 %v417, %v312
        %v442 = vmul.f32 %v417, %v313
        %v443 = vmul.f32 %v417, %v314
        %v444 = vmul.f32 %v417, %v315
        %v445 = vmul.f32 %v417, %v316
        %v446 = vmul.f32 %v417, %v317
        %v447 = vmul.f32 %v417, %v318
        %v448 = vmul.f32 %v417, %v319
        %v449 = vmul.f32 %v417, %v320
        %v450 = vmul.f32 %v417, %v321
        %v451 = vmul.f32 %v417, %v322
        %v452 = vmul.f32 %v417, %v323
        %v453 = vmul.f32 %v417, %v324
        %v454 = vmul.f32 %v417, %v325
        %v455 = vmul.f32 %v417, %v326
        %v456 = vmul.f32 %v417, %v327
        %v457 = vmul.f32 %v417, %v328
        %v458 = vmul.f32 %v417, %v329
        %v459 = vmul.f32 %v417, %v330
        %v460 = vmul.f32 %v417, %v331
        %v461 = vmul.f32 %v417, %v332
        %v462 = vmul.f32 %v417, %v333
        %v463 = vmul.f32 %v417, %v334
        %v464 = vmul.f32 %v417, %v335
        %v465 = vmul.f32 %v417, %v336
        %v466 = vmul.f32 %v417, %v337
        %v467 = vmul.f32 %v417, %v338
        %v468 = vmul.f32 %v417, %v339
        %v469 = vmul.f32 %v417, %v340
        %v470 = vmul.f32 %v417, %v341
        %v471 = vmul.f32 %v417, %v342
        %v472 = vmul.f32 %v417, %v343
        %v473 = vmul.f32 %v417, %v344
        %v474 = vmul.f32 %v417, %v345
        %v475 = vmul.f32 %v417, %v346
        %v476 = vmul.f32 %v417, %v347
        %v477 = vmul.f32 %v417, %v348
        %v478 = vmul.f32 %v417, %v349
        %v479 = vmul.f32 %v417, %v350
        %v480 = vmul.f32 %v417, %v351
        %v481 = vmul.f32 %v417, %v352
        %v482 = vmul.f32 %v417, %v353
        %v483 = vmul.f32 %v417, %v354
        %v484 = vmul.f32 %v417, %v355
        %v485 = vmul.f32 %v417, %v356
        %v486 = vmul.f32 %v417, %v357
        %v487 = vmul.f32 %v417, %v358
        %v488 = vmul.f32 %v417, %v359
        %v489 = vmul.f32 %v417, %v360
        %v490 = vmul.f32 %v417, %v361
        %v491 = vmul.f32 %v417, %v362
        %v492 = vmul.f32 %v417, %v363
        %v493 = vmul.f32 %v417, %v364
        %v494 = vmul.f32 %v417, %v365
        %v495 = vmul.f32 %v417, %v366
        %v496 = vmul.f32 %v417, %v367
        %v497 = vmul.f32 %v417, %v368
        %v498 = vmul.f32 %v417, %v369
        %v499 = vmul.f32 %v417, %v370
        %v500 = vmul.f32 %v417, %v371
        %v501 = vmul.f32 %v417, %v372
        %v502 = vmul.f32 %v417, %v373
        %v503 = vmul.f32 %v417, %v374
        %v504 = vmul.f32 %v417, %v375
        %v505 = vmul.f32 %v417, %v376
        %v506 = vmul.f32 %v417, %v377
        %v507 = vmul.f32 %v417, %v378
        %v508 = vmul.f32 %v417, %v379
        %v509 = vmul.f32 %v417, %v380
        %v510 = vmul.f32 %v417, %v381
        %v511 = vmul.f32 %v417, %v382
        %v512 = vmul.f32 %v417, %v383
        %v513 = vmul.f32 %v417, %v384
        %v514 = vmul.f32 %v417, %v385
        %v515 = vmul.f32 %v417, %v386
        %v516 = vmul.f32 %v417, %v387
        %v517 = vmul.f32 %v417, %v388
        %v518 = vmul.f32 %v417, %v389
        %v519 = vmul.f32 %v417, %v390
        %v520 = vmul.f32 %v417, %v391
        %v521 = vmul.f32 %v417, %v392
        %v522 = vmul.f32 %v417, %v393
        %v523 = vmul.f32 %v417, %v394
        %v524 = vmul.f32 %v417, %v395
        %v525 = vmul.f32 %v417, %v396
        %v526 = vmul.f32 %v417, %v397
        %v527 = vmul.f32 %v417, %v398
        %v528 = vmul.f32 %v417, %v399
        %v529 = vmul.f32 %v417, %v400
        %v530 = vmul.f32 %v417, %v401
        %v531 = vmul.f32 %v417, %v402
        %v532 = vmul.f32 %v417, %v403
        %v533 = vmul.f32 %v417, %v404
        %v534 = vmul.f32 %v417, %v405
        %v535 = vmul.f32 %v417, %v406
        %v536 = vmul.f32 %v417, %v407
        %v537 = vmul.f32 %v417, %v408
        %v538 = vmul.f32 %v417, %v409
        %v539 = vmul.f32 %v417, %v410
        %v540 = vmul.f32 %v417, %v411
        %v541 = vmul.f32 %v417, %v412
        %v542 = vmul.f32 %v417, %v413
        %v543 = vmul.f32 %v417, %v414
        %v544 = vmul.f32 %v417, %v415
        %v545 = vmul.f32 %v417, %v416
        %v546 = vld [vmem:[%s245] sm:$0xff]
        %v547 = vld [vmem:[%s245 + $0x8] sm:$0xff]
        %v548 = vld [vmem:[%s245 + $0x10] sm:$0xff]
        %v549 = vld [vmem:[%s245 + $0x18] sm:$0xff]
        %v550 = vld [vmem:[%s245 + $0x20] sm:$0xff]
        %v551 = vld [vmem:[%s245 + $0x28] sm:$0xff]
        %v552 = vld [vmem:[%s245 + $0x30] sm:$0xff]
        %v553 = vld [vmem:[%s245 + $0x38] sm:$0xff]
        %v554 = vld [vmem:[%s245 + $0x40] sm:$0xff]
        %v555 = vld [vmem:[%s245 + $0x48] sm:$0xff]
        %v556 = vld [vmem:[%s245 + $0x50] sm:$0xff]
        %v557 = vld [vmem:[%s245 + $0x58] sm:$0xff]
        %v558 = vld [vmem:[%s245 + $0x60] sm:$0xff]
        %v559 = vld [vmem:[%s245 + $0x68] sm:$0xff]
        %v560 = vld [vmem:[%s245 + $0x70] sm:$0xff]
        %v561 = vld [vmem:[%s245 + $0x78] sm:$0xff]
        %v562 = vld [vmem:[%s245 + $0x80] sm:$0xff]
        %v563 = vld [vmem:[%s245 + $0x88] sm:$0xff]
        %v564 = vld [vmem:[%s245 + $0x90] sm:$0xff]
        %v565 = vld [vmem:[%s245 + $0x98] sm:$0xff]
        %v566 = vld [vmem:[%s245 + $0xa0] sm:$0xff]
        %v567 = vld [vmem:[%s245 + $0xa8] sm:$0xff]
        %v568 = vld [vmem:[%s245 + $0xb0] sm:$0xff]
        %v569 = vld [vmem:[%s245 + $0xb8] sm:$0xff]
        %v570 = vld [vmem:[%s245 + $0xc0] sm:$0xff]
        %v571 = vld [vmem:[%s245 + $0xc8] sm:$0xff]
        %v572 = vld [vmem:[%s245 + $0xd0] sm:$0xff]
        %v573 = vld [vmem:[%s245 + $0xd8] sm:$0xff]
        %v574 = vld [vmem:[%s245 + $0xe0] sm:$0xff]
        %v575 = vld [vmem:[%s245 + $0xe8] sm:$0xff]
        %v576 = vld [vmem:[%s245 + $0xf0] sm:$0xff]
        %v577 = vld [vmem:[%s245 + $0xf8] sm:$0xff]
        %v578 = vld [vmem:[%s245 + $0x100] sm:$0xff]
        %v579 = vld [vmem:[%s245 + $0x108] sm:$0xff]
        %v580 = vld [vmem:[%s245 + $0x110] sm:$0xff]
        %v581 = vld [vmem:[%s245 + $0x118] sm:$0xff]
        %v582 = vld [vmem:[%s245 + $0x120] sm:$0xff]
        %v583 = vld [vmem:[%s245 + $0x128] sm:$0xff]
        %v584 = vld [vmem:[%s245 + $0x130] sm:$0xff]
        %v585 = vld [vmem:[%s245 + $0x138] sm:$0xff]
        %v586 = vld [vmem:[%s245 + $0x140] sm:$0xff]
        %v587 = vld [vmem:[%s245 + $0x148] sm:$0xff]
        %v588 = vld [vmem:[%s245 + $0x150] sm:$0xff]
        %v589 = vld [vmem:[%s245 + $0x158] sm:$0xff]
        %v590 = vld [vmem:[%s245 + $0x160] sm:$0xff]
        %v591 = vld [vmem:[%s245 + $0x168] sm:$0xff]
        %v592 = vld [vmem:[%s245 + $0x170] sm:$0xff]
        %v593 = vld [vmem:[%s245 + $0x178] sm:$0xff]
        %v594 = vld [vmem:[%s245 + $0x180] sm:$0xff]
        %v595 = vld [vmem:[%s245 + $0x188] sm:$0xff]
        %v596 = vld [vmem:[%s245 + $0x190] sm:$0xff]
        %v597 = vld [vmem:[%s245 + $0x198] sm:$0xff]
        %v598 = vld [vmem:[%s245 + $0x1a0] sm:$0xff]
        %v599 = vld [vmem:[%s245 + $0x1a8] sm:$0xff]
        %v600 = vld [vmem:[%s245 + $0x1b0] sm:$0xff]
        %v601 = vld [vmem:[%s245 + $0x1b8] sm:$0xff]
        %v602 = vld [vmem:[%s245 + $0x1c0] sm:$0xff]
        %v603 = vld [vmem:[%s245 + $0x1c8] sm:$0xff]
        %v604 = vld [vmem:[%s245 + $0x1d0] sm:$0xff]
        %v605 = vld [vmem:[%s245 + $0x1d8] sm:$0xff]
        %v606 = vld [vmem:[%s245 + $0x1e0] sm:$0xff]
        %v607 = vld [vmem:[%s245 + $0x1e8] sm:$0xff]
        %v608 = vld [vmem:[%s245 + $0x1f0] sm:$0xff]
        %v609 = vld [vmem:[%s245 + $0x1f8] sm:$0xff]
        %v610 = vld [vmem:[%s245 + $0x200] sm:$0xff]
        %v611 = vld [vmem:[%s245 + $0x208] sm:$0xff]
        %v612 = vld [vmem:[%s245 + $0x210] sm:$0xff]
        %v613 = vld [vmem:[%s245 + $0x218] sm:$0xff]
        %v614 = vld [vmem:[%s245 + $0x220] sm:$0xff]
        %v615 = vld [vmem:[%s245 + $0x228] sm:$0xff]
        %v616 = vld [vmem:[%s245 + $0x230] sm:$0xff]
        %v617 = vld [vmem:[%s245 + $0x238] sm:$0xff]
        %v618 = vld [vmem:[%s245 + $0x240] sm:$0xff]
        %v619 = vld [vmem:[%s245 + $0x248] sm:$0xff]
        %v620 = vld [vmem:[%s245 + $0x250] sm:$0xff]
        %v621 = vld [vmem:[%s245 + $0x258] sm:$0xff]
        %v622 = vld [vmem:[%s245 + $0x260] sm:$0xff]
        %v623 = vld [vmem:[%s245 + $0x268] sm:$0xff]
        %v624 = vld [vmem:[%s245 + $0x270] sm:$0xff]
        %v625 = vld [vmem:[%s245 + $0x278] sm:$0xff]
        %v626 = vld [vmem:[%s245 + $0x280] sm:$0xff]
        %v627 = vld [vmem:[%s245 + $0x288] sm:$0xff]
        %v628 = vld [vmem:[%s245 + $0x290] sm:$0xff]
        %v629 = vld [vmem:[%s245 + $0x298] sm:$0xff]
        %v630 = vld [vmem:[%s245 + $0x2a0] sm:$0xff]
        %v631 = vld [vmem:[%s245 + $0x2a8] sm:$0xff]
        %v632 = vld [vmem:[%s245 + $0x2b0] sm:$0xff]
        %v633 = vld [vmem:[%s245 + $0x2b8] sm:$0xff]
        %v634 = vld [vmem:[%s245 + $0x2c0] sm:$0xff]
        %v635 = vld [vmem:[%s245 + $0x2c8] sm:$0xff]
        %v636 = vld [vmem:[%s245 + $0x2d0] sm:$0xff]
        %v637 = vld [vmem:[%s245 + $0x2d8] sm:$0xff]
        %v638 = vld [vmem:[%s245 + $0x2e0] sm:$0xff]
        %v639 = vld [vmem:[%s245 + $0x2e8] sm:$0xff]
        %v640 = vld [vmem:[%s245 + $0x2f0] sm:$0xff]
        %v641 = vld [vmem:[%s245 + $0x2f8] sm:$0xff]
        %v642 = vld [vmem:[%s245 + $0x300] sm:$0xff]
        %v643 = vld [vmem:[%s245 + $0x308] sm:$0xff]
        %v644 = vld [vmem:[%s245 + $0x310] sm:$0xff]
        %v645 = vld [vmem:[%s245 + $0x318] sm:$0xff]
        %v646 = vld [vmem:[%s245 + $0x320] sm:$0xff]
        %v647 = vld [vmem:[%s245 + $0x328] sm:$0xff]
        %v648 = vld [vmem:[%s245 + $0x330] sm:$0xff]
        %v649 = vld [vmem:[%s245 + $0x338] sm:$0xff]
        %v650 = vld [vmem:[%s245 + $0x340] sm:$0xff]
        %v651 = vld [vmem:[%s245 + $0x348] sm:$0xff]
        %v652 = vld [vmem:[%s245 + $0x350] sm:$0xff]
        %v653 = vld [vmem:[%s245 + $0x358] sm:$0xff]
        %v654 = vld [vmem:[%s245 + $0x360] sm:$0xff]
        %v655 = vld [vmem:[%s245 + $0x368] sm:$0xff]
        %v656 = vld [vmem:[%s245 + $0x370] sm:$0xff]
        %v657 = vld [vmem:[%s245 + $0x378] sm:$0xff]
        %v658 = vld [vmem:[%s245 + $0x380] sm:$0xff]
        %v659 = vld [vmem:[%s245 + $0x388] sm:$0xff]
        %v660 = vld [vmem:[%s245 + $0x390] sm:$0xff]
        %v661 = vld [vmem:[%s245 + $0x398] sm:$0xff]
        %v662 = vld [vmem:[%s245 + $0x3a0] sm:$0xff]
        %v663 = vld [vmem:[%s245 + $0x3a8] sm:$0xff]
        %v664 = vld [vmem:[%s245 + $0x3b0] sm:$0xff]
        %v665 = vld [vmem:[%s245 + $0x3b8] sm:$0xff]
        %v666 = vld [vmem:[%s245 + $0x3c0] sm:$0xff]
        %v667 = vld [vmem:[%s245 + $0x3c8] sm:$0xff]
        %v668 = vld [vmem:[%s245 + $0x3d0] sm:$0xff]
        %v669 = vld [vmem:[%s245 + $0x3d8] sm:$0xff]
        %v670 = vld [vmem:[%s245 + $0x3e0] sm:$0xff]
        %v671 = vld [vmem:[%s245 + $0x3e8] sm:$0xff]
        %v672 = vld [vmem:[%s245 + $0x3f0] sm:$0xff]
        %v673 = vld [vmem:[%s245 + $0x3f8] sm:$0xff]
        %v674 = vstv %s286
        %v675 = vmul.f32 %v674, %v546
        %v676 = vmul.f32 %v674, %v547
        %v677 = vmul.f32 %v674, %v548
        %v678 = vmul.f32 %v674, %v549
        %v679 = vmul.f32 %v674, %v550
        %v680 = vmul.f32 %v674, %v551
        %v681 = vmul.f32 %v674, %v552
        %v682 = vmul.f32 %v674, %v553
        %v683 = vmul.f32 %v674, %v554
        %v684 = vmul.f32 %v674, %v555
        %v685 = vmul.f32 %v674, %v556
        %v686 = vmul.f32 %v674, %v557
        %v687 = vmul.f32 %v674, %v558
        %v688 = vmul.f32 %v674, %v559
        %v689 = vmul.f32 %v674, %v560
        %v690 = vmul.f32 %v674, %v561
        %v691 = vmul.f32 %v674, %v562
        %v692 = vmul.f32 %v674, %v563
        %v693 = vmul.f32 %v674, %v564
        %v694 = vmul.f32 %v674, %v565
        %v695 = vmul.f32 %v674, %v566
        %v696 = vmul.f32 %v674, %v567
        %v697 = vmul.f32 %v674, %v568
        %v698 = vmul.f32 %v674, %v569
        %v699 = vmul.f32 %v674, %v570
        %v700 = vmul.f32 %v674, %v571
        %v701 = vmul.f32 %v674, %v572
        %v702 = vmul.f32 %v674, %v573
        %v703 = vmul.f32 %v674, %v574
        %v704 = vmul.f32 %v674, %v575
        %v705 = vmul.f32 %v674, %v576
        %v706 = vmul.f32 %v674, %v577
        %v707 = vmul.f32 %v674, %v578
        %v708 = vmul.f32 %v674, %v579
        %v709 = vmul.f32 %v674, %v580
        %v710 = vmul.f32 %v674, %v581
        %v711 = vmul.f32 %v674, %v582
        %v712 = vmul.f32 %v674, %v583
        %v713 = vmul.f32 %v674, %v584
        %v714 = vmul.f32 %v674, %v585
        %v715 = vmul.f32 %v674, %v586
        %v716 = vmul.f32 %v674, %v587
        %v717 = vmul.f32 %v674, %v588
        %v718 = vmul.f32 %v674, %v589
        %v719 = vmul.f32 %v674, %v590
        %v720 = vmul.f32 %v674, %v591
        %v721 = vmul.f32 %v674, %v592
        %v722 = vmul.f32 %v674, %v593
        %v723 = vmul.f32 %v674, %v594
        %v724 = vmul.f32 %v674, %v595
        %v725 = vmul.f32 %v674, %v596
        %v726 = vmul.f32 %v674, %v597
        %v727 = vmul.f32 %v674, %v598
        %v728 = vmul.f32 %v674, %v599
        %v729 = vmul.f32 %v674, %v600
        %v730 = vmul.f32 %v674, %v601
        %v731 = vmul.f32 %v674, %v602
        %v732 = vmul.f32 %v674, %v603
        %v733 = vmul.f32 %v674, %v604
        %v734 = vmul.f32 %v674, %v605
        %v735 = vmul.f32 %v674, %v606
        %v736 = vmul.f32 %v674, %v607
        %v737 = vmul.f32 %v674, %v608
        %v738 = vmul.f32 %v674, %v609
        %v739 = vmul.f32 %v674, %v610
        %v740 = vmul.f32 %v674, %v611
        %v741 = vmul.f32 %v674, %v612
        %v742 = vmul.f32 %v674, %v613
        %v743 = vmul.f32 %v674, %v614
        %v744 = vmul.f32 %v674, %v615
        %v745 = vmul.f32 %v674, %v616
        %v746 = vmul.f32 %v674, %v617
        %v747 = vmul.f32 %v674, %v618
        %v748 = vmul.f32 %v674, %v619
        %v749 = vmul.f32 %v674, %v620
        %v750 = vmul.f32 %v674, %v621
        %v751 = vmul.f32 %v674, %v622
        %v752 = vmul.f32 %v674, %v623
        %v753 = vmul.f32 %v674, %v624
        %v754 = vmul.f32 %v674, %v625
        %v755 = vmul.f32 %v674, %v626
        %v756 = vmul.f32 %v674, %v627
        %v757 = vmul.f32 %v674, %v628
        %v758 = vmul.f32 %v674, %v629
        %v759 = vmul.f32 %v674, %v630
        %v760 = vmul.f32 %v674, %v631
        %v761 = vmul.f32 %v674, %v632
        %v762 = vmul.f32 %v674, %v633
        %v763 = vmul.f32 %v674, %v634
        %v764 = vmul.f32 %v674, %v635
        %v765 = vmul.f32 %v674, %v636
        %v766 = vmul.f32 %v674, %v637
        %v767 = vmul.f32 %v674, %v638
        %v768 = vmul.f32 %v674, %v639
        %v769 = vmul.f32 %v674, %v640
        %v770 = vmul.f32 %v674, %v641
        %v771 = vmul.f32 %v674, %v642
        %v772 = vmul.f32 %v674, %v643
        %v773 = vmul.f32 %v674, %v644
        %v774 = vmul.f32 %v674, %v645
        %v775 = vmul.f32 %v674, %v646
        %v776 = vmul.f32 %v674, %v647
        %v777 = vmul.f32 %v674, %v648
        %v778 = vmul.f32 %v674, %v649
        %v779 = vmul.f32 %v674, %v650
        %v780 = vmul.f32 %v674, %v651
        %v781 = vmul.f32 %v674, %v652
        %v782 = vmul.f32 %v674, %v653
        %v783 = vmul.f32 %v674, %v654
        %v784 = vmul.f32 %v674, %v655
        %v785 = vmul.f32 %v674, %v656
        %v786 = vmul.f32 %v674, %v657
        %v787 = vmul.f32 %v674, %v658
        %v788 = vmul.f32 %v674, %v659
        %v789 = vmul.f32 %v674, %v660
        %v790 = vmul.f32 %v674, %v661
        %v791 = vmul.f32 %v674, %v662
        %v792 = vmul.f32 %v674, %v663
        %v793 = vmul.f32 %v674, %v664
        %v794 = vmul.f32 %v674, %v665
        %v795 = vmul.f32 %v674, %v666
        %v796 = vmul.f32 %v674, %v667
        %v797 = vmul.f32 %v674, %v668
        %v798 = vmul.f32 %v674, %v669
        %v799 = vmul.f32 %v674, %v670
        %v800 = vmul.f32 %v674, %v671
        %v801 = vmul.f32 %v674, %v672
        %v802 = vmul.f32 %v674, %v673
        %v803 = vadd.f32 %v418, %v675
        %v804 = vadd.f32 %v419, %v676
        %v805 = vadd.f32 %v420, %v677
        %v806 = vadd.f32 %v421, %v678
        %v807 = vadd.f32 %v422, %v679
        %v808 = vadd.f32 %v423, %v680
        %v809 = vadd.f32 %v424, %v681
        %v810 = vadd.f32 %v425, %v682
        %v811 = vadd.f32 %v426, %v683
        %v812 = vadd.f32 %v427, %v684
        %v813 = vadd.f32 %v428, %v685
        %v814 = vadd.f32 %v429, %v686
        %v815 = vadd.f32 %v430, %v687
        %v816 = vadd.f32 %v431, %v688
        %v817 = vadd.f32 %v432, %v689
        %v818 = vadd.f32 %v433, %v690
        %v819 = vadd.f32 %v434, %v691
        %v820 = vadd.f32 %v435, %v692
        %v821 = vadd.f32 %v436, %v693
        %v822 = vadd.f32 %v437, %v694
        %v823 = vadd.f32 %v438, %v695
        %v824 = vadd.f32 %v439, %v696
        %v825 = vadd.f32 %v440, %v697
        %v826 = vadd.f32 %v441, %v698
        %v827 = vadd.f32 %v442, %v699
        %v828 = vadd.f32 %v443, %v700
        %v829 = vadd.f32 %v444, %v701
        %v830 = vadd.f32 %v445, %v702
        %v831 = vadd.f32 %v446, %v703
        %v832 = vadd.f32 %v447, %v704
        %v833 = vadd.f32 %v448, %v705
        %v834 = vadd.f32 %v449, %v706
        %v835 = vadd.f32 %v450, %v707
        %v836 = vadd.f32 %v451, %v708
        %v837 = vadd.f32 %v452, %v709
        %v838 = vadd.f32 %v453, %v710
        %v839 = vadd.f32 %v454, %v711
        %v840 = vadd.f32 %v455, %v712
        %v841 = vadd.f32 %v456, %v713
        %v842 = vadd.f32 %v457, %v714
        %v843 = vadd.f32 %v458, %v715
        %v844 = vadd.f32 %v459, %v716
        %v845 = vadd.f32 %v460, %v717
        %v846 = vadd.f32 %v461, %v718
        %v847 = vadd.f32 %v462, %v719
        %v848 = vadd.f32 %v463, %v720
        %v849 = vadd.f32 %v464, %v721
        %v850 = vadd.f32 %v465, %v722
        %v851 = vadd.f32 %v466, %v723
        %v852 = vadd.f32 %v467, %v724
        %v853 = vadd.f32 %v468, %v725
        %v854 = vadd.f32 %v469, %v726
        %v855 = vadd.f32 %v470, %v727
        %v856 = vadd.f32 %v471, %v728
        %v857 = vadd.f32 %v472, %v729
        %v858 = vadd.f32 %v473, %v730
        %v859 = vadd.f32 %v474, %v731
        %v860 = vadd.f32 %v475, %v732
        %v861 = vadd.f32 %v476, %v733
        %v862 = vadd.f32 %v477, %v734
        %v863 = vadd.f32 %v478, %v735
        %v864 = vadd.f32 %v479, %v736
        %v865 = vadd.f32 %v480, %v737
        %v866 = vadd.f32 %v481, %v738
        %v867 = vadd.f32 %v482, %v739
        %v868 = vadd.f32 %v483, %v740
        %v869 = vadd.f32 %v484, %v741
        %v870 = vadd.f32 %v485, %v742
        %v871 = vadd.f32 %v486, %v743
        %v872 = vadd.f32 %v487, %v744
        %v873 = vadd.f32 %v488, %v745
        %v874 = vadd.f32 %v489, %v746
        %v875 = vadd.f32 %v490, %v747
        %v876 = vadd.f32 %v491, %v748
        %v877 = vadd.f32 %v492, %v749
        %v878 = vadd.f32 %v493, %v750
        %v879 = vadd.f32 %v494, %v751
        %v880 = vadd.f32 %v495, %v752
        %v881 = vadd.f32 %v496, %v753
        %v882 = vadd.f32 %v497, %v754
        %v883 = vadd.f32 %v498, %v755
        %v884 = vadd.f32 %v499, %v756
        %v885 = vadd.f32 %v500, %v757
        %v886 = vadd.f32 %v501, %v758
        %v887 = vadd.f32 %v502, %v759
        %v888 = vadd.f32 %v503, %v760
        %v889 = vadd.f32 %v504, %v761
        %v890 = vadd.f32 %v505, %v762
        %v891 = vadd.f32 %v506, %v763
        %v892 = vadd.f32 %v507, %v764
        %v893 = vadd.f32 %v508, %v765
        %v894 = vadd.f32 %v509, %v766
        %v895 = vadd.f32 %v510, %v767
        %v896 = vadd.f32 %v511, %v768
        %v897 = vadd.f32 %v512, %v769
        %v898 = vadd.f32 %v513, %v770
        %v899 = vadd.f32 %v514, %v771
        %v900 = vadd.f32 %v515, %v772
        %v901 = vadd.f32 %v516, %v773
        %v902 = vadd.f32 %v517, %v774
        %v903 = vadd.f32 %v518, %v775
        %v904 = vadd.f32 %v519, %v776
        %v905 = vadd.f32 %v520, %v777
        %v906 = vadd.f32 %v521, %v778
        %v907 = vadd.f32 %v522, %v779
        %v908 = vadd.f32 %v523, %v780
        %v909 = vadd.f32 %v524, %v781
        %v910 = vadd.f32 %v525, %v782
        %v911 = vadd.f32 %v526, %v783
        %v912 = vadd.f32 %v527, %v784
        %v913 = vadd.f32 %v528, %v785
        %v914 = vadd.f32 %v529, %v786
        %v915 = vadd.f32 %v530, %v787
        %v916 = vadd.f32 %v531, %v788
        %v917 = vadd.f32 %v532, %v789
        %v918 = vadd.f32 %v533, %v790
        %v919 = vadd.f32 %v534, %v791
        %v920 = vadd.f32 %v535, %v792
        %v921 = vadd.f32 %v536, %v793
        %v922 = vadd.f32 %v537, %v794
        %v923 = vadd.f32 %v538, %v795
        %v924 = vadd.f32 %v539, %v796
        %v925 = vadd.f32 %v540, %v797
        %v926 = vadd.f32 %v541, %v798
        %v927 = vadd.f32 %v542, %v799
        %v928 = vadd.f32 %v543, %v800
        %v929 = vadd.f32 %v544, %v801
        %v930 = vadd.f32 %v545, %v802
        %931 = vst [vmem:[%s273] sm:$0xff] %v803
        %932 = vst [vmem:[%s273 + $0x8] sm:$0xff] %v804
        %933 = vst [vmem:[%s273 + $0x10] sm:$0xff] %v805
        %934 = vst [vmem:[%s273 + $0x18] sm:$0xff] %v806
        %935 = vst [vmem:[%s273 + $0x20] sm:$0xff] %v807
        %936 = vst [vmem:[%s273 + $0x28] sm:$0xff] %v808
        %937 = vst [vmem:[%s273 + $0x30] sm:$0xff] %v809
        %938 = vst [vmem:[%s273 + $0x38] sm:$0xff] %v810
        %939 = vst [vmem:[%s273 + $0x40] sm:$0xff] %v811
        %940 = vst [vmem:[%s273 + $0x48] sm:$0xff] %v812
        %941 = vst [vmem:[%s273 + $0x50] sm:$0xff] %v813
        %942 = vst [vmem:[%s273 + $0x58] sm:$0xff] %v814
        %943 = vst [vmem:[%s273 + $0x60] sm:$0xff] %v815
        %944 = vst [vmem:[%s273 + $0x68] sm:$0xff] %v816
        %945 = vst [vmem:[%s273 + $0x70] sm:$0xff] %v817
        %946 = vst [vmem:[%s273 + $0x78] sm:$0xff] %v818
        %947 = vst [vmem:[%s273 + $0x80] sm:$0xff] %v819
        %948 = vst [vmem:[%s273 + $0x88] sm:$0xff] %v820
        %949 = vst [vmem:[%s273 + $0x90] sm:$0xff] %v821
        %950 = vst [vmem:[%s273 + $0x98] sm:$0xff] %v822
        %951 = vst [vmem:[%s273 + $0xa0] sm:$0xff] %v823
        %952 = vst [vmem:[%s273 + $0xa8] sm:$0xff] %v824
        %953 = vst [vmem:[%s273 + $0xb0] sm:$0xff] %v825
        %954 = vst [vmem:[%s273 + $0xb8] sm:$0xff] %v826
        %955 = vst [vmem:[%s273 + $0xc0] sm:$0xff] %v827
        %956 = vst [vmem:[%s273 + $0xc8] sm:$0xff] %v828
        %957 = vst [vmem:[%s273 + $0xd0] sm:$0xff] %v829
        %958 = vst [vmem:[%s273 + $0xd8] sm:$0xff] %v830
        %959 = vst [vmem:[%s273 + $0xe0] sm:$0xff] %v831
        %960 = vst [vmem:[%s273 + $0xe8] sm:$0xff] %v832
        %961 = vst [vmem:[%s273 + $0xf0] sm:$0xff] %v833
        %962 = vst [vmem:[%s273 + $0xf8] sm:$0xff] %v834
        %963 = vst [vmem:[%s273 + $0x100] sm:$0xff] %v835
        %964 = vst [vmem:[%s273 + $0x108] sm:$0xff] %v836
        %965 = vst [vmem:[%s273 + $0x110] sm:$0xff] %v837
        %966 = vst [vmem:[%s273 + $0x118] sm:$0xff] %v838
        %967 = vst [vmem:[%s273 + $0x120] sm:$0xff] %v839
        %968 = vst [vmem:[%s273 + $0x128] sm:$0xff] %v840
        %969 = vst [vmem:[%s273 + $0x130] sm:$0xff] %v841
        %970 = vst [vmem:[%s273 + $0x138] sm:$0xff] %v842
        %971 = vst [vmem:[%s273 + $0x140] sm:$0xff] %v843
        %972 = vst [vmem:[%s273 + $0x148] sm:$0xff] %v844
        %973 = vst [vmem:[%s273 + $0x150] sm:$0xff] %v845
        %974 = vst [vmem:[%s273 + $0x158] sm:$0xff] %v846
        %975 = vst [vmem:[%s273 + $0x160] sm:$0xff] %v847
        %976 = vst [vmem:[%s273 + $0x168] sm:$0xff] %v848
        %977 = vst [vmem:[%s273 + $0x170] sm:$0xff] %v849
        %978 = vst [vmem:[%s273 + $0x178] sm:$0xff] %v850
        %979 = vst [vmem:[%s273 + $0x180] sm:$0xff] %v851
        %980 = vst [vmem:[%s273 + $0x188] sm:$0xff] %v852
        %981 = vst [vmem:[%s273 + $0x190] sm:$0xff] %v853
        %982 = vst [vmem:[%s273 + $0x198] sm:$0xff] %v854
        %983 = vst [vmem:[%s273 + $0x1a0] sm:$0xff] %v855
        %984 = vst [vmem:[%s273 + $0x1a8] sm:$0xff] %v856
        %985 = vst [vmem:[%s273 + $0x1b0] sm:$0xff] %v857
        %986 = vst [vmem:[%s273 + $0x1b8] sm:$0xff] %v858
        %987 = vst [vmem:[%s273 + $0x1c0] sm:$0xff] %v859
        %988 = vst [vmem:[%s273 + $0x1c8] sm:$0xff] %v860
        %989 = vst [vmem:[%s273 + $0x1d0] sm:$0xff] %v861
        %990 = vst [vmem:[%s273 + $0x1d8] sm:$0xff] %v862
        %991 = vst [vmem:[%s273 + $0x1e0] sm:$0xff] %v863
        %992 = vst [vmem:[%s273 + $0x1e8] sm:$0xff] %v864
        %993 = vst [vmem:[%s273 + $0x1f0] sm:$0xff] %v865
        %994 = vst [vmem:[%s273 + $0x1f8] sm:$0xff] %v866
        %995 = vst [vmem:[%s273 + $0x200] sm:$0xff] %v867
        %996 = vst [vmem:[%s273 + $0x208] sm:$0xff] %v868
        %997 = vst [vmem:[%s273 + $0x210] sm:$0xff] %v869
        %998 = vst [vmem:[%s273 + $0x218] sm:$0xff] %v870
        %999 = vst [vmem:[%s273 + $0x220] sm:$0xff] %v871
        %1000 = vst [vmem:[%s273 + $0x228] sm:$0xff] %v872
        %1001 = vst [vmem:[%s273 + $0x230] sm:$0xff] %v873
        %1002 = vst [vmem:[%s273 + $0x238] sm:$0xff] %v874
        %1003 = vst [vmem:[%s273 + $0x240] sm:$0xff] %v875
        %1004 = vst [vmem:[%s273 + $0x248] sm:$0xff] %v876
        %1005 = vst [vmem:[%s273 + $0x250] sm:$0xff] %v877
        %1006 = vst [vmem:[%s273 + $0x258] sm:$0xff] %v878
        %1007 = vst [vmem:[%s273 + $0x260] sm:$0xff] %v879
        %1008 = vst [vmem:[%s273 + $0x268] sm:$0xff] %v880
        %1009 = vst [vmem:[%s273 + $0x270] sm:$0xff] %v881
        %1010 = vst [vmem:[%s273 + $0x278] sm:$0xff] %v882
        %1011 = vst [vmem:[%s273 + $0x280] sm:$0xff] %v883
        %1012 = vst [vmem:[%s273 + $0x288] sm:$0xff] %v884
        %1013 = vst [vmem:[%s273 + $0x290] sm:$0xff] %v885
        %1014 = vst [vmem:[%s273 + $0x298] sm:$0xff] %v886
        %1015 = vst [vmem:[%s273 + $0x2a0] sm:$0xff] %v887
        %1016 = vst [vmem:[%s273 + $0x2a8] sm:$0xff] %v888
        %1017 = vst [vmem:[%s273 + $0x2b0] sm:$0xff] %v889
        %1018 = vst [vmem:[%s273 + $0x2b8] sm:$0xff] %v890
        %1019 = vst [vmem:[%s273 + $0x2c0] sm:$0xff] %v891
        %1020 = vst [vmem:[%s273 + $0x2c8] sm:$0xff] %v892
        %1021 = vst [vmem:[%s273 + $0x2d0] sm:$0xff] %v893
        %1022 = vst [vmem:[%s273 + $0x2d8] sm:$0xff] %v894
        %1023 = vst [vmem:[%s273 + $0x2e0] sm:$0xff] %v895
        %1024 = vst [vmem:[%s273 + $0x2e8] sm:$0xff] %v896
        %1025 = vst [vmem:[%s273 + $0x2f0] sm:$0xff] %v897
        %1026 = vst [vmem:[%s273 + $0x2f8] sm:$0xff] %v898
        %1027 = vst [vmem:[%s273 + $0x300] sm:$0xff] %v899
        %1028 = vst [vmem:[%s273 + $0x308] sm:$0xff] %v900
        %1029 = vst [vmem:[%s273 + $0x310] sm:$0xff] %v901
        %1030 = vst [vmem:[%s273 + $0x318] sm:$0xff] %v902
        %1031 = vst [vmem:[%s273 + $0x320] sm:$0xff] %v903
        %1032 = vst [vmem:[%s273 + $0x328] sm:$0xff] %v904
        %1033 = vst [vmem:[%s273 + $0x330] sm:$0xff] %v905
        %1034 = vst [vmem:[%s273 + $0x338] sm:$0xff] %v906
        %1035 = vst [vmem:[%s273 + $0x340] sm:$0xff] %v907
        %1036 = vst [vmem:[%s273 + $0x348] sm:$0xff] %v908
        %1037 = vst [vmem:[%s273 + $0x350] sm:$0xff] %v909
        %1038 = vst [vmem:[%s273 + $0x358] sm:$0xff] %v910
        %1039 = vst [vmem:[%s273 + $0x360] sm:$0xff] %v911
        %1040 = vst [vmem:[%s273 + $0x368] sm:$0xff] %v912
        %1041 = vst [vmem:[%s273 + $0x370] sm:$0xff] %v913
        %1042 = vst [vmem:[%s273 + $0x378] sm:$0xff] %v914
        %1043 = vst [vmem:[%s273 + $0x380] sm:$0xff] %v915
        %1044 = vst [vmem:[%s273 + $0x388] sm:$0xff] %v916
        %1045 = vst [vmem:[%s273 + $0x390] sm:$0xff] %v917
        %1046 = vst [vmem:[%s273 + $0x398] sm:$0xff] %v918
        %1047 = vst [vmem:[%s273 + $0x3a0] sm:$0xff] %v919
        %1048 = vst [vmem:[%s273 + $0x3a8] sm:$0xff] %v920
        %1049 = vst [vmem:[%s273 + $0x3b0] sm:$0xff] %v921
        %1050 = vst [vmem:[%s273 + $0x3b8] sm:$0xff] %v922
        %1051 = vst [vmem:[%s273 + $0x3c0] sm:$0xff] %v923
        %1052 = vst [vmem:[%s273 + $0x3c8] sm:$0xff] %v924
        %1053 = vst [vmem:[%s273 + $0x3d0] sm:$0xff] %v925
        %1054 = vst [vmem:[%s273 + $0x3d8] sm:$0xff] %v926
        %1055 = vst [vmem:[%s273 + $0x3e0] sm:$0xff] %v927
        %1056 = vst [vmem:[%s273 + $0x3e8] sm:$0xff] %v928
        %1057 = vst [vmem:[%s273 + $0x3f0] sm:$0xff] %v929
        %1058 = vst [vmem:[%s273 + $0x3f8] sm:$0xff] %v930
        %v1059 = vld [vmem:[%s236] sm:$0xff]
        %v1060 = vld [vmem:[%s236 + $0x8] sm:$0xff]
        %v1061 = vld [vmem:[%s236 + $0x10] sm:$0xff]
        %v1062 = vld [vmem:[%s236 + $0x18] sm:$0xff]
        %v1063 = vld [vmem:[%s236 + $0x20] sm:$0xff]
        %v1064 = vld [vmem:[%s236 + $0x28] sm:$0xff]
        %v1065 = vld [vmem:[%s236 + $0x30] sm:$0xff]
        %v1066 = vld [vmem:[%s236 + $0x38] sm:$0xff]
        %v1067 = vld [vmem:[%s236 + $0x40] sm:$0xff]
        %v1068 = vld [vmem:[%s236 + $0x48] sm:$0xff]
        %v1069 = vld [vmem:[%s236 + $0x50] sm:$0xff]
        %v1070 = vld [vmem:[%s236 + $0x58] sm:$0xff]
        %v1071 = vld [vmem:[%s236 + $0x60] sm:$0xff]
        %v1072 = vld [vmem:[%s236 + $0x68] sm:$0xff]
        %v1073 = vld [vmem:[%s236 + $0x70] sm:$0xff]
        %v1074 = vld [vmem:[%s236 + $0x78] sm:$0xff]
        %v1075 = vld [vmem:[%s236 + $0x80] sm:$0xff]
        %v1076 = vld [vmem:[%s236 + $0x88] sm:$0xff]
        %v1077 = vld [vmem:[%s236 + $0x90] sm:$0xff]
        %v1078 = vld [vmem:[%s236 + $0x98] sm:$0xff]
        %v1079 = vld [vmem:[%s236 + $0xa0] sm:$0xff]
        %v1080 = vld [vmem:[%s236 + $0xa8] sm:$0xff]
        %v1081 = vld [vmem:[%s236 + $0xb0] sm:$0xff]
        %v1082 = vld [vmem:[%s236 + $0xb8] sm:$0xff]
        %v1083 = vld [vmem:[%s236 + $0xc0] sm:$0xff]
        %v1084 = vld [vmem:[%s236 + $0xc8] sm:$0xff]
        %v1085 = vld [vmem:[%s236 + $0xd0] sm:$0xff]
        %v1086 = vld [vmem:[%s236 + $0xd8] sm:$0xff]
        %v1087 = vld [vmem:[%s236 + $0xe0] sm:$0xff]
        %v1088 = vld [vmem:[%s236 + $0xe8] sm:$0xff]
        %v1089 = vld [vmem:[%s236 + $0xf0] sm:$0xff]
        %v1090 = vld [vmem:[%s236 + $0xf8] sm:$0xff]
        %v1091 = vld [vmem:[%s236 + $0x100] sm:$0xff]
        %v1092 = vld [vmem:[%s236 + $0x108] sm:$0xff]
        %v1093 = vld [vmem:[%s236 + $0x110] sm:$0xff]
        %v1094 = vld [vmem:[%s236 + $0x118] sm:$0xff]
        %v1095 = vld [vmem:[%s236 + $0x120] sm:$0xff]
        %v1096 = vld [vmem:[%s236 + $0x128] sm:$0xff]
        %v1097 = vld [vmem:[%s236 + $0x130] sm:$0xff]
        %v1098 = vld [vmem:[%s236 + $0x138] sm:$0xff]
        %v1099 = vld [vmem:[%s236 + $0x140] sm:$0xff]
        %v1100 = vld [vmem:[%s236 + $0x148] sm:$0xff]
        %v1101 = vld [vmem:[%s236 + $0x150] sm:$0xff]
        %v1102 = vld [vmem:[%s236 + $0x158] sm:$0xff]
        %v1103 = vld [vmem:[%s236 + $0x160] sm:$0xff]
        %v1104 = vld [vmem:[%s236 + $0x168] sm:$0xff]
        %v1105 = vld [vmem:[%s236 + $0x170] sm:$0xff]
        %v1106 = vld [vmem:[%s236 + $0x178] sm:$0xff]
        %v1107 = vld [vmem:[%s236 + $0x180] sm:$0xff]
        %v1108 = vld [vmem:[%s236 + $0x188] sm:$0xff]
        %v1109 = vld [vmem:[%s236 + $0x190] sm:$0xff]
        %v1110 = vld [vmem:[%s236 + $0x198] sm:$0xff]
        %v1111 = vld [vmem:[%s236 + $0x1a0] sm:$0xff]
        %v1112 = vld [vmem:[%s236 + $0x1a8] sm:$0xff]
        %v1113 = vld [vmem:[%s236 + $0x1b0] sm:$0xff]
        %v1114 = vld [vmem:[%s236 + $0x1b8] sm:$0xff]
        %v1115 = vld [vmem:[%s236 + $0x1c0] sm:$0xff]
        %v1116 = vld [vmem:[%s236 + $0x1c8] sm:$0xff]
        %v1117 = vld [vmem:[%s236 + $0x1d0] sm:$0xff]
        %v1118 = vld [vmem:[%s236 + $0x1d8] sm:$0xff]
        %v1119 = vld [vmem:[%s236 + $0x1e0] sm:$0xff]
        %v1120 = vld [vmem:[%s236 + $0x1e8] sm:$0xff]
        %v1121 = vld [vmem:[%s236 + $0x1f0] sm:$0xff]
        %v1122 = vld [vmem:[%s236 + $0x1f8] sm:$0xff]
        %v1123 = vld [vmem:[%s236 + $0x200] sm:$0xff]
        %v1124 = vld [vmem:[%s236 + $0x208] sm:$0xff]
        %v1125 = vld [vmem:[%s236 + $0x210] sm:$0xff]
        %v1126 = vld [vmem:[%s236 + $0x218] sm:$0xff]
        %v1127 = vld [vmem:[%s236 + $0x220] sm:$0xff]
        %v1128 = vld [vmem:[%s236 + $0x228] sm:$0xff]
        %v1129 = vld [vmem:[%s236 + $0x230] sm:$0xff]
        %v1130 = vld [vmem:[%s236 + $0x238] sm:$0xff]
        %v1131 = vld [vmem:[%s236 + $0x240] sm:$0xff]
        %v1132 = vld [vmem:[%s236 + $0x248] sm:$0xff]
        %v1133 = vld [vmem:[%s236 + $0x250] sm:$0xff]
        %v1134 = vld [vmem:[%s236 + $0x258] sm:$0xff]
        %v1135 = vld [vmem:[%s236 + $0x260] sm:$0xff]
        %v1136 = vld [vmem:[%s236 + $0x268] sm:$0xff]
        %v1137 = vld [vmem:[%s236 + $0x270] sm:$0xff]
        %v1138 = vld [vmem:[%s236 + $0x278] sm:$0xff]
        %v1139 = vld [vmem:[%s236 + $0x280] sm:$0xff]
        %v1140 = vld [vmem:[%s236 + $0x288] sm:$0xff]
        %v1141 = vld [vmem:[%s236 + $0x290] sm:$0xff]
        %v1142 = vld [vmem:[%s236 + $0x298] sm:$0xff]
        %v1143 = vld [vmem:[%s236 + $0x2a0] sm:$0xff]
        %v1144 = vld [vmem:[%s236 + $0x2a8] sm:$0xff]
        %v1145 = vld [vmem:[%s236 + $0x2b0] sm:$0xff]
        %v1146 = vld [vmem:[%s236 + $0x2b8] sm:$0xff]
        %v1147 = vld [vmem:[%s236 + $0x2c0] sm:$0xff]
        %v1148 = vld [vmem:[%s236 + $0x2c8] sm:$0xff]
        %v1149 = vld [vmem:[%s236 + $0x2d0] sm:$0xff]
        %v1150 = vld [vmem:[%s236 + $0x2d8] sm:$0xff]
        %v1151 = vld [vmem:[%s236 + $0x2e0] sm:$0xff]
        %v1152 = vld [vmem:[%s236 + $0x2e8] sm:$0xff]
        %v1153 = vld [vmem:[%s236 + $0x2f0] sm:$0xff]
        %v1154 = vld [vmem:[%s236 + $0x2f8] sm:$0xff]
        %v1155 = vld [vmem:[%s236 + $0x300] sm:$0xff]
        %v1156 = vld [vmem:[%s236 + $0x308] sm:$0xff]
        %v1157 = vld [vmem:[%s236 + $0x310] sm:$0xff]
        %v1158 = vld [vmem:[%s236 + $0x318] sm:$0xff]
        %v1159 = vld [vmem:[%s236 + $0x320] sm:$0xff]
        %v1160 = vld [vmem:[%s236 + $0x328] sm:$0xff]
        %v1161 = vld [vmem:[%s236 + $0x330] sm:$0xff]
        %v1162 = vld [vmem:[%s236 + $0x338] sm:$0xff]
        %v1163 = vld [vmem:[%s236 + $0x340] sm:$0xff]
        %v1164 = vld [vmem:[%s236 + $0x348] sm:$0xff]
        %v1165 = vld [vmem:[%s236 + $0x350] sm:$0xff]
        %v1166 = vld [vmem:[%s236 + $0x358] sm:$0xff]
        %v1167 = vld [vmem:[%s236 + $0x360] sm:$0xff]
        %v1168 = vld [vmem:[%s236 + $0x368] sm:$0xff]
        %v1169 = vld [vmem:[%s236 + $0x370] sm:$0xff]
        %v1170 = vld [vmem:[%s236 + $0x378] sm:$0xff]
        %v1171 = vld [vmem:[%s236 + $0x380] sm:$0xff]
        %v1172 = vld [vmem:[%s236 + $0x388] sm:$0xff]
        %v1173 = vld [vmem:[%s236 + $0x390] sm:$0xff]
        %v1174 = vld [vmem:[%s236 + $0x398] sm:$0xff]
        %v1175 = vld [vmem:[%s236 + $0x3a0] sm:$0xff]
        %v1176 = vld [vmem:[%s236 + $0x3a8] sm:$0xff]
        %v1177 = vld [vmem:[%s236 + $0x3b0] sm:$0xff]
        %v1178 = vld [vmem:[%s236 + $0x3b8] sm:$0xff]
        %v1179 = vld [vmem:[%s236 + $0x3c0] sm:$0xff]
        %v1180 = vld [vmem:[%s236 + $0x3c8] sm:$0xff]
        %v1181 = vld [vmem:[%s236 + $0x3d0] sm:$0xff]
        %v1182 = vld [vmem:[%s236 + $0x3d8] sm:$0xff]
        %v1183 = vld [vmem:[%s236 + $0x3e0] sm:$0xff]
        %v1184 = vld [vmem:[%s236 + $0x3e8] sm:$0xff]
        %v1185 = vld [vmem:[%s236 + $0x3f0] sm:$0xff]
        %v1186 = vld [vmem:[%s236 + $0x3f8] sm:$0xff]
        %v1187 = vstv %s287
        %v1188 = vmul.f32 %v1187, %v1059
        %v1189 = vmul.f32 %v1187, %v1060
        %v1190 = vmul.f32 %v1187, %v1061
        %v1191 = vmul.f32 %v1187, %v1062
        %v1192 = vmul.f32 %v1187, %v1063
        %v1193 = vmul.f32 %v1187, %v1064
        %v1194 = vmul.f32 %v1187, %v1065
        %v1195 = vmul.f32 %v1187, %v1066
        %v1196 = vmul.f32 %v1187, %v1067
        %v1197 = vmul.f32 %v1187, %v1068
        %v1198 = vmul.f32 %v1187, %v1069
        %v1199 = vmul.f32 %v1187, %v1070
        %v1200 = vmul.f32 %v1187, %v1071
        %v1201 = vmul.f32 %v1187, %v1072
        %v1202 = vmul.f32 %v1187, %v1073
        %v1203 = vmul.f32 %v1187, %v1074
        %v1204 = vmul.f32 %v1187, %v1075
        %v1205 = vmul.f32 %v1187, %v1076
        %v1206 = vmul.f32 %v1187, %v1077
        %v1207 = vmul.f32 %v1187, %v1078
        %v1208 = vmul.f32 %v1187, %v1079
        %v1209 = vmul.f32 %v1187, %v1080
        %v1210 = vmul.f32 %v1187, %v1081
        %v1211 = vmul.f32 %v1187, %v1082
        %v1212 = vmul.f32 %v1187, %v1083
        %v1213 = vmul.f32 %v1187, %v1084
        %v1214 = vmul.f32 %v1187, %v1085
        %v1215 = vmul.f32 %v1187, %v1086
        %v1216 = vmul.f32 %v1187, %v1087
        %v1217 = vmul.f32 %v1187, %v1088
        %v1218 = vmul.f32 %v1187, %v1089
        %v1219 = vmul.f32 %v1187, %v1090
        %v1220 = vmul.f32 %v1187, %v1091
        %v1221 = vmul.f32 %v1187, %v1092
        %v1222 = vmul.f32 %v1187, %v1093
        %v1223 = vmul.f32 %v1187, %v1094
        %v1224 = vmul.f32 %v1187, %v1095
        %v1225 = vmul.f32 %v1187, %v1096
        %v1226 = vmul.f32 %v1187, %v1097
        %v1227 = vmul.f32 %v1187, %v1098
        %v1228 = vmul.f32 %v1187, %v1099
        %v1229 = vmul.f32 %v1187, %v1100
        %v1230 = vmul.f32 %v1187, %v1101
        %v1231 = vmul.f32 %v1187, %v1102
        %v1232 = vmul.f32 %v1187, %v1103
        %v1233 = vmul.f32 %v1187, %v1104
        %v1234 = vmul.f32 %v1187, %v1105
        %v1235 = vmul.f32 %v1187, %v1106
        %v1236 = vmul.f32 %v1187, %v1107
        %v1237 = vmul.f32 %v1187, %v1108
        %v1238 = vmul.f32 %v1187, %v1109
        %v1239 = vmul.f32 %v1187, %v1110
        %v1240 = vmul.f32 %v1187, %v1111
        %v1241 = vmul.f32 %v1187, %v1112
        %v1242 = vmul.f32 %v1187, %v1113
        %v1243 = vmul.f32 %v1187, %v1114
        %v1244 = vmul.f32 %v1187, %v1115
        %v1245 = vmul.f32 %v1187, %v1116
        %v1246 = vmul.f32 %v1187, %v1117
        %v1247 = vmul.f32 %v1187, %v1118
        %v1248 = vmul.f32 %v1187, %v1119
        %v1249 = vmul.f32 %v1187, %v1120
        %v1250 = vmul.f32 %v1187, %v1121
        %v1251 = vmul.f32 %v1187, %v1122
        %v1252 = vmul.f32 %v1187, %v1123
        %v1253 = vmul.f32 %v1187, %v1124
        %v1254 = vmul.f32 %v1187, %v1125
        %v1255 = vmul.f32 %v1187, %v1126
        %v1256 = vmul.f32 %v1187, %v1127
        %v1257 = vmul.f32 %v1187, %v1128
        %v1258 = vmul.f32 %v1187, %v1129
        %v1259 = vmul.f32 %v1187, %v1130
        %v1260 = vmul.f32 %v1187, %v1131
        %v1261 = vmul.f32 %v1187, %v1132
        %v1262 = vmul.f32 %v1187, %v1133
        %v1263 = vmul.f32 %v1187, %v1134
        %v1264 = vmul.f32 %v1187, %v1135
        %v1265 = vmul.f32 %v1187, %v1136
        %v1266 = vmul.f32 %v1187, %v1137
        %v1267 = vmul.f32 %v1187, %v1138
        %v1268 = vmul.f32 %v1187, %v1139
        %v1269 = vmul.f32 %v1187, %v1140
        %v1270 = vmul.f32 %v1187, %v1141
        %v1271 = vmul.f32 %v1187, %v1142
        %v1272 = vmul.f32 %v1187, %v1143
        %v1273 = vmul.f32 %v1187, %v1144
        %v1274 = vmul.f32 %v1187, %v1145
        %v1275 = vmul.f32 %v1187, %v1146
        %v1276 = vmul.f32 %v1187, %v1147
        %v1277 = vmul.f32 %v1187, %v1148
        %v1278 = vmul.f32 %v1187, %v1149
        %v1279 = vmul.f32 %v1187, %v1150
        %v1280 = vmul.f32 %v1187, %v1151
        %v1281 = vmul.f32 %v1187, %v1152
        %v1282 = vmul.f32 %v1187, %v1153
        %v1283 = vmul.f32 %v1187, %v1154
        %v1284 = vmul.f32 %v1187, %v1155
        %v1285 = vmul.f32 %v1187, %v1156
        %v1286 = vmul.f32 %v1187, %v1157
        %v1287 = vmul.f32 %v1187, %v1158
        %v1288 = vmul.f32 %v1187, %v1159
        %v1289 = vmul.f32 %v1187, %v1160
        %v1290 = vmul.f32 %v1187, %v1161
        %v1291 = vmul.f32 %v1187, %v1162
        %v1292 = vmul.f32 %v1187, %v1163
        %v1293 = vmul.f32 %v1187, %v1164
        %v1294 = vmul.f32 %v1187, %v1165
        %v1295 = vmul.f32 %v1187, %v1166
        %v1296 = vmul.f32 %v1187, %v1167
        %v1297 = vmul.f32 %v1187, %v1168
        %v1298 = vmul.f32 %v1187, %v1169
        %v1299 = vmul.f32 %v1187, %v1170
        %v1300 = vmul.f32 %v1187, %v1171
        %v1301 = vmul.f32 %v1187, %v1172
        %v1302 = vmul.f32 %v1187, %v1173
        %v1303 = vmul.f32 %v1187, %v1174
        %v1304 = vmul.f32 %v1187, %v1175
        %v1305 = vmul.f32 %v1187, %v1176
        %v1306 = vmul.f32 %v1187, %v1177
        %v1307 = vmul.f32 %v1187, %v1178
        %v1308 = vmul.f32 %v1187, %v1179
        %v1309 = vmul.f32 %v1187, %v1180
        %v1310 = vmul.f32 %v1187, %v1181
        %v1311 = vmul.f32 %v1187, %v1182
        %v1312 = vmul.f32 %v1187, %v1183
        %v1313 = vmul.f32 %v1187, %v1184
        %v1314 = vmul.f32 %v1187, %v1185
        %v1315 = vmul.f32 %v1187, %v1186
        %v1316 = vld [vmem:[%s245] sm:$0xff]
        %v1317 = vld [vmem:[%s245 + $0x8] sm:$0xff]
        %v1318 = vld [vmem:[%s245 + $0x10] sm:$0xff]
        %v1319 = vld [vmem:[%s245 + $0x18] sm:$0xff]
        %v1320 = vld [vmem:[%s245 + $0x20] sm:$0xff]
        %v1321 = vld [vmem:[%s245 + $0x28] sm:$0xff]
        %v1322 = vld [vmem:[%s245 + $0x30] sm:$0xff]
        %v1323 = vld [vmem:[%s245 + $0x38] sm:$0xff]
        %v1324 = vld [vmem:[%s245 + $0x40] sm:$0xff]
        %v1325 = vld [vmem:[%s245 + $0x48] sm:$0xff]
        %v1326 = vld [vmem:[%s245 + $0x50] sm:$0xff]
        %v1327 = vld [vmem:[%s245 + $0x58] sm:$0xff]
        %v1328 = vld [vmem:[%s245 + $0x60] sm:$0xff]
        %v1329 = vld [vmem:[%s245 + $0x68] sm:$0xff]
        %v1330 = vld [vmem:[%s245 + $0x70] sm:$0xff]
        %v1331 = vld [vmem:[%s245 + $0x78] sm:$0xff]
        %v1332 = vld [vmem:[%s245 + $0x80] sm:$0xff]
        %v1333 = vld [vmem:[%s245 + $0x88] sm:$0xff]
        %v1334 = vld [vmem:[%s245 + $0x90] sm:$0xff]
        %v1335 = vld [vmem:[%s245 + $0x98] sm:$0xff]
        %v1336 = vld [vmem:[%s245 + $0xa0] sm:$0xff]
        %v1337 = vld [vmem:[%s245 + $0xa8] sm:$0xff]
        %v1338 = vld [vmem:[%s245 + $0xb0] sm:$0xff]
        %v1339 = vld [vmem:[%s245 + $0xb8] sm:$0xff]
        %v1340 = vld [vmem:[%s245 + $0xc0] sm:$0xff]
        %v1341 = vld [vmem:[%s245 + $0xc8] sm:$0xff]
        %v1342 = vld [vmem:[%s245 + $0xd0] sm:$0xff]
        %v1343 = vld [vmem:[%s245 + $0xd8] sm:$0xff]
        %v1344 = vld [vmem:[%s245 + $0xe0] sm:$0xff]
        %v1345 = vld [vmem:[%s245 + $0xe8] sm:$0xff]
        %v1346 = vld [vmem:[%s245 + $0xf0] sm:$0xff]
        %v1347 = vld [vmem:[%s245 + $0xf8] sm:$0xff]
        %v1348 = vld [vmem:[%s245 + $0x100] sm:$0xff]
        %v1349 = vld [vmem:[%s245 + $0x108] sm:$0xff]
        %v1350 = vld [vmem:[%s245 + $0x110] sm:$0xff]
        %v1351 = vld [vmem:[%s245 + $0x118] sm:$0xff]
        %v1352 = vld [vmem:[%s245 + $0x120] sm:$0xff]
        %v1353 = vld [vmem:[%s245 + $0x128] sm:$0xff]
        %v1354 = vld [vmem:[%s245 + $0x130] sm:$0xff]
        %v1355 = vld [vmem:[%s245 + $0x138] sm:$0xff]
        %v1356 = vld [vmem:[%s245 + $0x140] sm:$0xff]
        %v1357 = vld [vmem:[%s245 + $0x148] sm:$0xff]
        %v1358 = vld [vmem:[%s245 + $0x150] sm:$0xff]
        %v1359 = vld [vmem:[%s245 + $0x158] sm:$0xff]
        %v1360 = vld [vmem:[%s245 + $0x160] sm:$0xff]
        %v1361 = vld [vmem:[%s245 + $0x168] sm:$0xff]
        %v1362 = vld [vmem:[%s245 + $0x170] sm:$0xff]
        %v1363 = vld [vmem:[%s245 + $0x178] sm:$0xff]
        %v1364 = vld [vmem:[%s245 + $0x180] sm:$0xff]
        %v1365 = vld [vmem:[%s245 + $0x188] sm:$0xff]
        %v1366 = vld [vmem:[%s245 + $0x190] sm:$0xff]
        %v1367 = vld [vmem:[%s245 + $0x198] sm:$0xff]
        %v1368 = vld [vmem:[%s245 + $0x1a0] sm:$0xff]
        %v1369 = vld [vmem:[%s245 + $0x1a8] sm:$0xff]
        %v1370 = vld [vmem:[%s245 + $0x1b0] sm:$0xff]
        %v1371 = vld [vmem:[%s245 + $0x1b8] sm:$0xff]
        %v1372 = vld [vmem:[%s245 + $0x1c0] sm:$0xff]
        %v1373 = vld [vmem:[%s245 + $0x1c8] sm:$0xff]
        %v1374 = vld [vmem:[%s245 + $0x1d0] sm:$0xff]
        %v1375 = vld [vmem:[%s245 + $0x1d8] sm:$0xff]
        %v1376 = vld [vmem:[%s245 + $0x1e0] sm:$0xff]
        %v1377 = vld [vmem:[%s245 + $0x1e8] sm:$0xff]
        %v1378 = vld [vmem:[%s245 + $0x1f0] sm:$0xff]
        %v1379 = vld [vmem:[%s245 + $0x1f8] sm:$0xff]
        %v1380 = vld [vmem:[%s245 + $0x200] sm:$0xff]
        %v1381 = vld [vmem:[%s245 + $0x208] sm:$0xff]
        %v1382 = vld [vmem:[%s245 + $0x210] sm:$0xff]
        %v1383 = vld [vmem:[%s245 + $0x218] sm:$0xff]
        %v1384 = vld [vmem:[%s245 + $0x220] sm:$0xff]
        %v1385 = vld [vmem:[%s245 + $0x228] sm:$0xff]
        %v1386 = vld [vmem:[%s245 + $0x230] sm:$0xff]
        %v1387 = vld [vmem:[%s245 + $0x238] sm:$0xff]
        %v1388 = vld [vmem:[%s245 + $0x240] sm:$0xff]
        %v1389 = vld [vmem:[%s245 + $0x248] sm:$0xff]
        %v1390 = vld [vmem:[%s245 + $0x250] sm:$0xff]
        %v1391 = vld [vmem:[%s245 + $0x258] sm:$0xff]
        %v1392 = vld [vmem:[%s245 + $0x260] sm:$0xff]
        %v1393 = vld [vmem:[%s245 + $0x268] sm:$0xff]
        %v1394 = vld [vmem:[%s245 + $0x270] sm:$0xff]
        %v1395 = vld [vmem:[%s245 + $0x278] sm:$0xff]
        %v1396 = vld [vmem:[%s245 + $0x280] sm:$0xff]
        %v1397 = vld [vmem:[%s245 + $0x288] sm:$0xff]
        %v1398 = vld [vmem:[%s245 + $0x290] sm:$0xff]
        %v1399 = vld [vmem:[%s245 + $0x298] sm:$0xff]
        %v1400 = vld [vmem:[%s245 + $0x2a0] sm:$0xff]
        %v1401 = vld [vmem:[%s245 + $0x2a8] sm:$0xff]
        %v1402 = vld [vmem:[%s245 + $0x2b0] sm:$0xff]
        %v1403 = vld [vmem:[%s245 + $0x2b8] sm:$0xff]
        %v1404 = vld [vmem:[%s245 + $0x2c0] sm:$0xff]
        %v1405 = vld [vmem:[%s245 + $0x2c8] sm:$0xff]
        %v1406 = vld [vmem:[%s245 + $0x2d0] sm:$0xff]
        %v1407 = vld [vmem:[%s245 + $0x2d8] sm:$0xff]
        %v1408 = vld [vmem:[%s245 + $0x2e0] sm:$0xff]
        %v1409 = vld [vmem:[%s245 + $0x2e8] sm:$0xff]
        %v1410 = vld [vmem:[%s245 + $0x2f0] sm:$0xff]
        %v1411 = vld [vmem:[%s245 + $0x2f8] sm:$0xff]
        %v1412 = vld [vmem:[%s245 + $0x300] sm:$0xff]
        %v1413 = vld [vmem:[%s245 + $0x308] sm:$0xff]
        %v1414 = vld [vmem:[%s245 + $0x310] sm:$0xff]
        %v1415 = vld [vmem:[%s245 + $0x318] sm:$0xff]
        %v1416 = vld [vmem:[%s245 + $0x320] sm:$0xff]
        %v1417 = vld [vmem:[%s245 + $0x328] sm:$0xff]
        %v1418 = vld [vmem:[%s245 + $0x330] sm:$0xff]
        %v1419 = vld [vmem:[%s245 + $0x338] sm:$0xff]
        %v1420 = vld [vmem:[%s245 + $0x340] sm:$0xff]
        %v1421 = vld [vmem:[%s245 + $0x348] sm:$0xff]
        %v1422 = vld [vmem:[%s245 + $0x350] sm:$0xff]
        %v1423 = vld [vmem:[%s245 + $0x358] sm:$0xff]
        %v1424 = vld [vmem:[%s245 + $0x360] sm:$0xff]
        %v1425 = vld [vmem:[%s245 + $0x368] sm:$0xff]
        %v1426 = vld [vmem:[%s245 + $0x370] sm:$0xff]
        %v1427 = vld [vmem:[%s245 + $0x378] sm:$0xff]
        %v1428 = vld [vmem:[%s245 + $0x380] sm:$0xff]
        %v1429 = vld [vmem:[%s245 + $0x388] sm:$0xff]
        %v1430 = vld [vmem:[%s245 + $0x390] sm:$0xff]
        %v1431 = vld [vmem:[%s245 + $0x398] sm:$0xff]
        %v1432 = vld [vmem:[%s245 + $0x3a0] sm:$0xff]
        %v1433 = vld [vmem:[%s245 + $0x3a8] sm:$0xff]
        %v1434 = vld [vmem:[%s245 + $0x3b0] sm:$0xff]
        %v1435 = vld [vmem:[%s245 + $0x3b8] sm:$0xff]
        %v1436 = vld [vmem:[%s245 + $0x3c0] sm:$0xff]
        %v1437 = vld [vmem:[%s245 + $0x3c8] sm:$0xff]
        %v1438 = vld [vmem:[%s245 + $0x3d0] sm:$0xff]
        %v1439 = vld [vmem:[%s245 + $0x3d8] sm:$0xff]
        %v1440 = vld [vmem:[%s245 + $0x3e0] sm:$0xff]
        %v1441 = vld [vmem:[%s245 + $0x3e8] sm:$0xff]
        %v1442 = vld [vmem:[%s245 + $0x3f0] sm:$0xff]
        %v1443 = vld [vmem:[%s245 + $0x3f8] sm:$0xff]
        %v1444 = vstv %s288
        %v1445 = vmul.f32 %v1444, %v1316
        %v1446 = vmul.f32 %v1444, %v1317
        %v1447 = vmul.f32 %v1444, %v1318
        %v1448 = vmul.f32 %v1444, %v1319
        %v1449 = vmul.f32 %v1444, %v1320
        %v1450 = vmul.f32 %v1444, %v1321
        %v1451 = vmul.f32 %v1444, %v1322
        %v1452 = vmul.f32 %v1444, %v1323
        %v1453 = vmul.f32 %v1444, %v1324
        %v1454 = vmul.f32 %v1444, %v1325
        %v1455 = vmul.f32 %v1444, %v1326
        %v1456 = vmul.f32 %v1444, %v1327
        %v1457 = vmul.f32 %v1444, %v1328
        %v1458 = vmul.f32 %v1444, %v1329
        %v1459 = vmul.f32 %v1444, %v1330
        %v1460 = vmul.f32 %v1444, %v1331
        %v1461 = vmul.f32 %v1444, %v1332
        %v1462 = vmul.f32 %v1444, %v1333
        %v1463 = vmul.f32 %v1444, %v1334
        %v1464 = vmul.f32 %v1444, %v1335
        %v1465 = vmul.f32 %v1444, %v1336
        %v1466 = vmul.f32 %v1444, %v1337
        %v1467 = vmul.f32 %v1444, %v1338
        %v1468 = vmul.f32 %v1444, %v1339
        %v1469 = vmul.f32 %v1444, %v1340
        %v1470 = vmul.f32 %v1444, %v1341
        %v1471 = vmul.f32 %v1444, %v1342
        %v1472 = vmul.f32 %v1444, %v1343
        %v1473 = vmul.f32 %v1444, %v1344
        %v1474 = vmul.f32 %v1444, %v1345
        %v1475 = vmul.f32 %v1444, %v1346
        %v1476 = vmul.f32 %v1444, %v1347
        %v1477 = vmul.f32 %v1444, %v1348
        %v1478 = vmul.f32 %v1444, %v1349
        %v1479 = vmul.f32 %v1444, %v1350
        %v1480 = vmul.f32 %v1444, %v1351
        %v1481 = vmul.f32 %v1444, %v1352
        %v1482 = vmul.f32 %v1444, %v1353
        %v1483 = vmul.f32 %v1444, %v1354
        %v1484 = vmul.f32 %v1444, %v1355
        %v1485 = vmul.f32 %v1444, %v1356
        %v1486 = vmul.f32 %v1444, %v1357
        %v1487 = vmul.f32 %v1444, %v1358
        %v1488 = vmul.f32 %v1444, %v1359
        %v1489 = vmul.f32 %v1444, %v1360
        %v1490 = vmul.f32 %v1444, %v1361
        %v1491 = vmul.f32 %v1444, %v1362
        %v1492 = vmul.f32 %v1444, %v1363
        %v1493 = vmul.f32 %v1444, %v1364
        %v1494 = vmul.f32 %v1444, %v1365
        %v1495 = vmul.f32 %v1444, %v1366
        %v1496 = vmul.f32 %v1444, %v1367
        %v1497 = vmul.f32 %v1444, %v1368
        %v1498 = vmul.f32 %v1444, %v1369
        %v1499 = vmul.f32 %v1444, %v1370
        %v1500 = vmul.f32 %v1444, %v1371
        %v1501 = vmul.f32 %v1444, %v1372
        %v1502 = vmul.f32 %v1444, %v1373
        %v1503 = vmul.f32 %v1444, %v1374
        %v1504 = vmul.f32 %v1444, %v1375
        %v1505 = vmul.f32 %v1444, %v1376
        %v1506 = vmul.f32 %v1444, %v1377
        %v1507 = vmul.f32 %v1444, %v1378
        %v1508 = vmul.f32 %v1444, %v1379
        %v1509 = vmul.f32 %v1444, %v1380
        %v1510 = vmul.f32 %v1444, %v1381
        %v1511 = vmul.f32 %v1444, %v1382
        %v1512 = vmul.f32 %v1444, %v1383
        %v1513 = vmul.f32 %v1444, %v1384
        %v1514 = vmul.f32 %v1444, %v1385
        %v1515 = vmul.f32 %v1444, %v1386
        %v1516 = vmul.f32 %v1444, %v1387
        %v1517 = vmul.f32 %v1444, %v1388
        %v1518 = vmul.f32 %v1444, %v1389
        %v1519 = vmul.f32 %v1444, %v1390
        %v1520 = vmul.f32 %v1444, %v1391
        %v1521 = vmul.f32 %v1444, %v1392
        %v1522 = vmul.f32 %v1444, %v1393
        %v1523 = vmul.f32 %v1444, %v1394
        %v1524 = vmul.f32 %v1444, %v1395
        %v1525 = vmul.f32 %v1444, %v1396
        %v1526 = vmul.f32 %v1444, %v1397
        %v1527 = vmul.f32 %v1444, %v1398
        %v1528 = vmul.f32 %v1444, %v1399
        %v1529 = vmul.f32 %v1444, %v1400
        %v1530 = vmul.f32 %v1444, %v1401
        %v1531 = vmul.f32 %v1444, %v1402
        %v1532 = vmul.f32 %v1444, %v1403
        %v1533 = vmul.f32 %v1444, %v1404
        %v1534 = vmul.f32 %v1444, %v1405
        %v1535 = vmul.f32 %v1444, %v1406
        %v1536 = vmul.f32 %v1444, %v1407
        %v1537 = vmul.f32 %v1444, %v1408
        %v1538 = vmul.f32 %v1444, %v1409
        %v1539 = vmul.f32 %v1444, %v1410
        %v1540 = vmul.f32 %v1444, %v1411
        %v1541 = vmul.f32 %v1444, %v1412
        %v1542 = vmul.f32 %v1444, %v1413
        %v1543 = vmul.f32 %v1444, %v1414
        %v1544 = vmul.f32 %v1444, %v1415
        %v1545 = vmul.f32 %v1444, %v1416
        %v1546 = vmul.f32 %v1444, %v1417
        %v1547 = vmul.f32 %v1444, %v1418
        %v1548 = vmul.f32 %v1444, %v1419
        %v1549 = vmul.f32 %v1444, %v1420
        %v1550 = vmul.f32 %v1444, %v1421
        %v1551 = vmul.f32 %v1444, %v1422
        %v1552 = vmul.f32 %v1444, %v1423
        %v1553 = vmul.f32 %v1444, %v1424
        %v1554 = vmul.f32 %v1444, %v1425
        %v1555 = vmul.f32 %v1444, %v1426
        %v1556 = vmul.f32 %v1444, %v1427
        %v1557 = vmul.f32 %v1444, %v1428
        %v1558 = vmul.f32 %v1444, %v1429
        %v1559 = vmul.f32 %v1444, %v1430
        %v1560 = vmul.f32 %v1444, %v1431
        %v1561 = vmul.f32 %v1444, %v1432
        %v1562 = vmul.f32 %v1444, %v1433
        %v1563 = vmul.f32 %v1444, %v1434
        %v1564 = vmul.f32 %v1444, %v1435
        %v1565 = vmul.f32 %v1444, %v1436
        %v1566 = vmul.f32 %v1444, %v1437
        %v1567 = vmul.f32 %v1444, %v1438
        %v1568 = vmul.f32 %v1444, %v1439
        %v1569 = vmul.f32 %v1444, %v1440
        %v1570 = vmul.f32 %v1444, %v1441
        %v1571 = vmul.f32 %v1444, %v1442
        %v1572 = vmul.f32 %v1444, %v1443
        %v1573 = vadd.f32 %v1188, %v1445
        %v1574 = vadd.f32 %v1189, %v1446
        %v1575 = vadd.f32 %v1190, %v1447
        %v1576 = vadd.f32 %v1191, %v1448
        %v1577 = vadd.f32 %v1192, %v1449
        %v1578 = vadd.f32 %v1193, %v1450
        %v1579 = vadd.f32 %v1194, %v1451
        %v1580 = vadd.f32 %v1195, %v1452
        %v1581 = vadd.f32 %v1196, %v1453
        %v1582 = vadd.f32 %v1197, %v1454
        %v1583 = vadd.f32 %v1198, %v1455
        %v1584 = vadd.f32 %v1199, %v1456
        %v1585 = vadd.f32 %v1200, %v1457
        %v1586 = vadd.f32 %v1201, %v1458
        %v1587 = vadd.f32 %v1202, %v1459
        %v1588 = vadd.f32 %v1203, %v1460
        %v1589 = vadd.f32 %v1204, %v1461
        %v1590 = vadd.f32 %v1205, %v1462
        %v1591 = vadd.f32 %v1206, %v1463
        %v1592 = vadd.f32 %v1207, %v1464
        %v1593 = vadd.f32 %v1208, %v1465
        %v1594 = vadd.f32 %v1209, %v1466
        %v1595 = vadd.f32 %v1210, %v1467
        %v1596 = vadd.f32 %v1211, %v1468
        %v1597 = vadd.f32 %v1212, %v1469
        %v1598 = vadd.f32 %v1213, %v1470
        %v1599 = vadd.f32 %v1214, %v1471
        %v1600 = vadd.f32 %v1215, %v1472
        %v1601 = vadd.f32 %v1216, %v1473
        %v1602 = vadd.f32 %v1217, %v1474
        %v1603 = vadd.f32 %v1218, %v1475
        %v1604 = vadd.f32 %v1219, %v1476
        %v1605 = vadd.f32 %v1220, %v1477
        %v1606 = vadd.f32 %v1221, %v1478
        %v1607 = vadd.f32 %v1222, %v1479
        %v1608 = vadd.f32 %v1223, %v1480
        %v1609 = vadd.f32 %v1224, %v1481
        %v1610 = vadd.f32 %v1225, %v1482
        %v1611 = vadd.f32 %v1226, %v1483
        %v1612 = vadd.f32 %v1227, %v1484
        %v1613 = vadd.f32 %v1228, %v1485
        %v1614 = vadd.f32 %v1229, %v1486
        %v1615 = vadd.f32 %v1230, %v1487
        %v1616 = vadd.f32 %v1231, %v1488
        %v1617 = vadd.f32 %v1232, %v1489
        %v1618 = vadd.f32 %v1233, %v1490
        %v1619 = vadd.f32 %v1234, %v1491
        %v1620 = vadd.f32 %v1235, %v1492
        %v1621 = vadd.f32 %v1236, %v1493
        %v1622 = vadd.f32 %v1237, %v1494
        %v1623 = vadd.f32 %v1238, %v1495
        %v1624 = vadd.f32 %v1239, %v1496
        %v1625 = vadd.f32 %v1240, %v1497
        %v1626 = vadd.f32 %v1241, %v1498
        %v1627 = vadd.f32 %v1242, %v1499
        %v1628 = vadd.f32 %v1243, %v1500
        %v1629 = vadd.f32 %v1244, %v1501
        %v1630 = vadd.f32 %v1245, %v1502
        %v1631 = vadd.f32 %v1246, %v1503
        %v1632 = vadd.f32 %v1247, %v1504
        %v1633 = vadd.f32 %v1248, %v1505
        %v1634 = vadd.f32 %v1249, %v1506
        %v1635 = vadd.f32 %v1250, %v1507
        %v1636 = vadd.f32 %v1251, %v1508
        %v1637 = vadd.f32 %v1252, %v1509
        %v1638 = vadd.f32 %v1253, %v1510
        %v1639 = vadd.f32 %v1254, %v1511
        %v1640 = vadd.f32 %v1255, %v1512
        %v1641 = vadd.f32 %v1256, %v1513
        %v1642 = vadd.f32 %v1257, %v1514
        %v1643 = vadd.f32 %v1258, %v1515
        %v1644 = vadd.f32 %v1259, %v1516
        %v1645 = vadd.f32 %v1260, %v1517
        %v1646 = vadd.f32 %v1261, %v1518
        %v1647 = vadd.f32 %v1262, %v1519
        %v1648 = vadd.f32 %v1263, %v1520
        %v1649 = vadd.f32 %v1264, %v1521
        %v1650 = vadd.f32 %v1265, %v1522
        %v1651 = vadd.f32 %v1266, %v1523
        %v1652 = vadd.f32 %v1267, %v1524
        %v1653 = vadd.f32 %v1268, %v1525
        %v1654 = vadd.f32 %v1269, %v1526
        %v1655 = vadd.f32 %v1270, %v1527
        %v1656 = vadd.f32 %v1271, %v1528
        %v1657 = vadd.f32 %v1272, %v1529
        %v1658 = vadd.f32 %v1273, %v1530
        %v1659 = vadd.f32 %v1274, %v1531
        %v1660 = vadd.f32 %v1275, %v1532
        %v1661 = vadd.f32 %v1276, %v1533
        %v1662 = vadd.f32 %v1277, %v1534
        %v1663 = vadd.f32 %v1278, %v1535
        %v1664 = vadd.f32 %v1279, %v1536
        %v1665 = vadd.f32 %v1280, %v1537
        %v1666 = vadd.f32 %v1281, %v1538
        %v1667 = vadd.f32 %v1282, %v1539
        %v1668 = vadd.f32 %v1283, %v1540
        %v1669 = vadd.f32 %v1284, %v1541
        %v1670 = vadd.f32 %v1285, %v1542
        %v1671 = vadd.f32 %v1286, %v1543
        %v1672 = vadd.f32 %v1287, %v1544
        %v1673 = vadd.f32 %v1288, %v1545
        %v1674 = vadd.f32 %v1289, %v1546
        %v1675 = vadd.f32 %v1290, %v1547
        %v1676 = vadd.f32 %v1291, %v1548
        %v1677 = vadd.f32 %v1292, %v1549
        %v1678 = vadd.f32 %v1293, %v1550
        %v1679 = vadd.f32 %v1294, %v1551
        %v1680 = vadd.f32 %v1295, %v1552
        %v1681 = vadd.f32 %v1296, %v1553
        %v1682 = vadd.f32 %v1297, %v1554
        %v1683 = vadd.f32 %v1298, %v1555
        %v1684 = vadd.f32 %v1299, %v1556
        %v1685 = vadd.f32 %v1300, %v1557
        %v1686 = vadd.f32 %v1301, %v1558
        %v1687 = vadd.f32 %v1302, %v1559
        %v1688 = vadd.f32 %v1303, %v1560
        %v1689 = vadd.f32 %v1304, %v1561
        %v1690 = vadd.f32 %v1305, %v1562
        %v1691 = vadd.f32 %v1306, %v1563
        %v1692 = vadd.f32 %v1307, %v1564
        %v1693 = vadd.f32 %v1308, %v1565
        %v1694 = vadd.f32 %v1309, %v1566
        %v1695 = vadd.f32 %v1310, %v1567
        %v1696 = vadd.f32 %v1311, %v1568
        %v1697 = vadd.f32 %v1312, %v1569
        %v1698 = vadd.f32 %v1313, %v1570
        %v1699 = vadd.f32 %v1314, %v1571
        %v1700 = vadd.f32 %v1315, %v1572
        %1701 = vst [vmem:[%s280] sm:$0xff] %v1573
        %1702 = vst [vmem:[%s280 + $0x8] sm:$0xff] %v1574
        %1703 = vst [vmem:[%s280 + $0x10] sm:$0xff] %v1575
        %1704 = vst [vmem:[%s280 + $0x18] sm:$0xff] %v1576
        %1705 = vst [vmem:[%s280 + $0x20] sm:$0xff] %v1577
        %1706 = vst [vmem:[%s280 + $0x28] sm:$0xff] %v1578
        %1707 = vst [vmem:[%s280 + $0x30] sm:$0xff] %v1579
        %1708 = vst [vmem:[%s280 + $0x38] sm:$0xff] %v1580
        %1709 = vst [vmem:[%s280 + $0x40] sm:$0xff] %v1581
        %1710 = vst [vmem:[%s280 + $0x48] sm:$0xff] %v1582
        %1711 = vst [vmem:[%s280 + $0x50] sm:$0xff] %v1583
        %1712 = vst [vmem:[%s280 + $0x58] sm:$0xff] %v1584
        %1713 = vst [vmem:[%s280 + $0x60] sm:$0xff] %v1585
        %1714 = vst [vmem:[%s280 + $0x68] sm:$0xff] %v1586
        %1715 = vst [vmem:[%s280 + $0x70] sm:$0xff] %v1587
        %1716 = vst [vmem:[%s280 + $0x78] sm:$0xff] %v1588
        %1717 = vst [vmem:[%s280 + $0x80] sm:$0xff] %v1589
        %1718 = vst [vmem:[%s280 + $0x88] sm:$0xff] %v1590
        %1719 = vst [vmem:[%s280 + $0x90] sm:$0xff] %v1591
        %1720 = vst [vmem:[%s280 + $0x98] sm:$0xff] %v1592
        %1721 = vst [vmem:[%s280 + $0xa0] sm:$0xff] %v1593
        %1722 = vst [vmem:[%s280 + $0xa8] sm:$0xff] %v1594
        %1723 = vst [vmem:[%s280 + $0xb0] sm:$0xff] %v1595
        %1724 = vst [vmem:[%s280 + $0xb8] sm:$0xff] %v1596
        %1725 = vst [vmem:[%s280 + $0xc0] sm:$0xff] %v1597
        %1726 = vst [vmem:[%s280 + $0xc8] sm:$0xff] %v1598
        %1727 = vst [vmem:[%s280 + $0xd0] sm:$0xff] %v1599
        %1728 = vst [vmem:[%s280 + $0xd8] sm:$0xff] %v1600
        %1729 = vst [vmem:[%s280 + $0xe0] sm:$0xff] %v1601
        %1730 = vst [vmem:[%s280 + $0xe8] sm:$0xff] %v1602
        %1731 = vst [vmem:[%s280 + $0xf0] sm:$0xff] %v1603
        %1732 = vst [vmem:[%s280 + $0xf8] sm:$0xff] %v1604
        %1733 = vst [vmem:[%s280 + $0x100] sm:$0xff] %v1605
        %1734 = vst [vmem:[%s280 + $0x108] sm:$0xff] %v1606
        %1735 = vst [vmem:[%s280 + $0x110] sm:$0xff] %v1607
        %1736 = vst [vmem:[%s280 + $0x118] sm:$0xff] %v1608
        %1737 = vst [vmem:[%s280 + $0x120] sm:$0xff] %v1609
        %1738 = vst [vmem:[%s280 + $0x128] sm:$0xff] %v1610
        %1739 = vst [vmem:[%s280 + $0x130] sm:$0xff] %v1611
        %1740 = vst [vmem:[%s280 + $0x138] sm:$0xff] %v1612
        %1741 = vst [vmem:[%s280 + $0x140] sm:$0xff] %v1613
        %1742 = vst [vmem:[%s280 + $0x148] sm:$0xff] %v1614
        %1743 = vst [vmem:[%s280 + $0x150] sm:$0xff] %v1615
        %1744 = vst [vmem:[%s280 + $0x158] sm:$0xff] %v1616
        %1745 = vst [vmem:[%s280 + $0x160] sm:$0xff] %v1617
        %1746 = vst [vmem:[%s280 + $0x168] sm:$0xff] %v1618
        %1747 = vst [vmem:[%s280 + $0x170] sm:$0xff] %v1619
        %1748 = vst [vmem:[%s280 + $0x178] sm:$0xff] %v1620
        %1749 = vst [vmem:[%s280 + $0x180] sm:$0xff] %v1621
        %1750 = vst [vmem:[%s280 + $0x188] sm:$0xff] %v1622
        %1751 = vst [vmem:[%s280 + $0x190] sm:$0xff] %v1623
        %1752 = vst [vmem:[%s280 + $0x198] sm:$0xff] %v1624
        %1753 = vst [vmem:[%s280 + $0x1a0] sm:$0xff] %v1625
        %1754 = vst [vmem:[%s280 + $0x1a8] sm:$0xff] %v1626
        %1755 = vst [vmem:[%s280 + $0x1b0] sm:$0xff] %v1627
        %1756 = vst [vmem:[%s280 + $0x1b8] sm:$0xff] %v1628
        %1757 = vst [vmem:[%s280 + $0x1c0] sm:$0xff] %v1629
        %1758 = vst [vmem:[%s280 + $0x1c8] sm:$0xff] %v1630
        %1759 = vst [vmem:[%s280 + $0x1d0] sm:$0xff] %v1631
        %1760 = vst [vmem:[%s280 + $0x1d8] sm:$0xff] %v1632
        %1761 = vst [vmem:[%s280 + $0x1e0] sm:$0xff] %v1633
        %1762 = vst [vmem:[%s280 + $0x1e8] sm:$0xff] %v1634
        %1763 = vst [vmem:[%s280 + $0x1f0] sm:$0xff] %v1635
        %1764 = vst [vmem:[%s280 + $0x1f8] sm:$0xff] %v1636
        %1765 = vst [vmem:[%s280 + $0x200] sm:$0xff] %v1637
        %1766 = vst [vmem:[%s280 + $0x208] sm:$0xff] %v1638
        %1767 = vst [vmem:[%s280 + $0x210] sm:$0xff] %v1639
        %1768 = vst [vmem:[%s280 + $0x218] sm:$0xff] %v1640
        %1769 = vst [vmem:[%s280 + $0x220] sm:$0xff] %v1641
        %1770 = vst [vmem:[%s280 + $0x228] sm:$0xff] %v1642
        %1771 = vst [vmem:[%s280 + $0x230] sm:$0xff] %v1643
        %1772 = vst [vmem:[%s280 + $0x238] sm:$0xff] %v1644
        %1773 = vst [vmem:[%s280 + $0x240] sm:$0xff] %v1645
        %1774 = vst [vmem:[%s280 + $0x248] sm:$0xff] %v1646
        %1775 = vst [vmem:[%s280 + $0x250] sm:$0xff] %v1647
        %1776 = vst [vmem:[%s280 + $0x258] sm:$0xff] %v1648
        %1777 = vst [vmem:[%s280 + $0x260] sm:$0xff] %v1649
        %1778 = vst [vmem:[%s280 + $0x268] sm:$0xff] %v1650
        %1779 = vst [vmem:[%s280 + $0x270] sm:$0xff] %v1651
        %1780 = vst [vmem:[%s280 + $0x278] sm:$0xff] %v1652
        %1781 = vst [vmem:[%s280 + $0x280] sm:$0xff] %v1653
        %1782 = vst [vmem:[%s280 + $0x288] sm:$0xff] %v1654
        %1783 = vst [vmem:[%s280 + $0x290] sm:$0xff] %v1655
        %1784 = vst [vmem:[%s280 + $0x298] sm:$0xff] %v1656
        %1785 = vst [vmem:[%s280 + $0x2a0] sm:$0xff] %v1657
        %1786 = vst [vmem:[%s280 + $0x2a8] sm:$0xff] %v1658
        %1787 = vst [vmem:[%s280 + $0x2b0] sm:$0xff] %v1659
        %1788 = vst [vmem:[%s280 + $0x2b8] sm:$0xff] %v1660
        %1789 = vst [vmem:[%s280 + $0x2c0] sm:$0xff] %v1661
        %1790 = vst [vmem:[%s280 + $0x2c8] sm:$0xff] %v1662
        %1791 = vst [vmem:[%s280 + $0x2d0] sm:$0xff] %v1663
        %1792 = vst [vmem:[%s280 + $0x2d8] sm:$0xff] %v1664
        %1793 = vst [vmem:[%s280 + $0x2e0] sm:$0xff] %v1665
        %1794 = vst [vmem:[%s280 + $0x2e8] sm:$0xff] %v1666
        %1795 = vst [vmem:[%s280 + $0x2f0] sm:$0xff] %v1667
        %1796 = vst [vmem:[%s280 + $0x2f8] sm:$0xff] %v1668
        %1797 = vst [vmem:[%s280 + $0x300] sm:$0xff] %v1669
        %1798 = vst [vmem:[%s280 + $0x308] sm:$0xff] %v1670
        %1799 = vst [vmem:[%s280 + $0x310] sm:$0xff] %v1671
        %1800 = vst [vmem:[%s280 + $0x318] sm:$0xff] %v1672
        %1801 = vst [vmem:[%s280 + $0x320] sm:$0xff] %v1673
        %1802 = vst [vmem:[%s280 + $0x328] sm:$0xff] %v1674
        %1803 = vst [vmem:[%s280 + $0x330] sm:$0xff] %v1675
        %1804 = vst [vmem:[%s280 + $0x338] sm:$0xff] %v1676
        %1805 = vst [vmem:[%s280 + $0x340] sm:$0xff] %v1677
        %1806 = vst [vmem:[%s280 + $0x348] sm:$0xff] %v1678
        %1807 = vst [vmem:[%s280 + $0x350] sm:$0xff] %v1679
        %1808 = vst [vmem:[%s280 + $0x358] sm:$0xff] %v1680
        %1809 = vst [vmem:[%s280 + $0x360] sm:$0xff] %v1681
        %1810 = vst [vmem:[%s280 + $0x368] sm:$0xff] %v1682
        %1811 = vst [vmem:[%s280 + $0x370] sm:$0xff] %v1683
        %1812 = vst [vmem:[%s280 + $0x378] sm:$0xff] %v1684
        %1813 = vst [vmem:[%s280 + $0x380] sm:$0xff] %v1685
        %1814 = vst [vmem:[%s280 + $0x388] sm:$0xff] %v1686
        %1815 = vst [vmem:[%s280 + $0x390] sm:$0xff] %v1687
        %1816 = vst [vmem:[%s280 + $0x398] sm:$0xff] %v1688
        %1817 = vst [vmem:[%s280 + $0x3a0] sm:$0xff] %v1689
        %1818 = vst [vmem:[%s280 + $0x3a8] sm:$0xff] %v1690
        %1819 = vst [vmem:[%s280 + $0x3b0] sm:$0xff] %v1691
        %1820 = vst [vmem:[%s280 + $0x3b8] sm:$0xff] %v1692
        %1821 = vst [vmem:[%s280 + $0x3c0] sm:$0xff] %v1693
        %1822 = vst [vmem:[%s280 + $0x3c8] sm:$0xff] %v1694
        %1823 = vst [vmem:[%s280 + $0x3d0] sm:$0xff] %v1695
        %1824 = vst [vmem:[%s280 + $0x3d8] sm:$0xff] %v1696
        %1825 = vst [vmem:[%s280 + $0x3e0] sm:$0xff] %v1697
        %1826 = vst [vmem:[%s280 + $0x3e8] sm:$0xff] %v1698
        %1827 = vst [vmem:[%s280 + $0x3f0] sm:$0xff] %v1699
        %1828 = vst [vmem:[%s280 + $0x3f8] sm:$0xff] %v1700
        %s1829 = sand.u32 %s110, 1
        %s1830 = scalar_lea.sflag [#allocation4], %s1829
        %s1831 = sand.u32 %s110, 1
        %s1832 = smul.addr %s1831, 1024
        %s1833 = scalar_lea.vmem [#allocation9], %s1832
        %s1834 = sand.u32 %s136, 1
        %s1835 = scalar_lea.sflag [#allocation11], %s1834
        %s1836 = sand.u32 %s136, 1
        %s1837 = smul.addr %s1836, 1024
        %s1838 = scalar_lea.vmem [#allocation10], %s1837
        // Predicated region
        $region45: #{tpu_custom_call.1} parent=31 // pred_check
          %p1839 = pneg %p120
        $region46: #{tpu_custom_call.1} parent=31 // pred_check_branch
          %1841 = sbr.rel (%p1839) target = $region48
        $region47: #{tpu_custom_call.1} parent=31 // pred_region
          %s1842 = smul.u32 16, %s29
          %s1844 = ssub.s32 16384, 16384
          %1845 = vsyncadd %s1830, %s1844
          %s1846 = smul.addr %s1842, 8
          %s1847 = smul.addr %s1846, 128
          %s1848 = scalar_lea.hbm %s3, %s1847
          %s1849 = sshll.u32 %s1833, 4
          %s1850 = int_to_ptr.vmem [resolvable:$true] %s1849
          %1855 = dma.vmem_to_hbm [thread:$0]  %s1850, 16384, %s1848, %s1830, 1024, 1024, 64
        $region48: #{tpu_custom_call.1} parent=31 // pred_fallthru
          _
        // Predicated region
        $region49: #{tpu_custom_call.1} parent=31 // pred_check
          %p1856 = pneg %p146
        $region50: #{tpu_custom_call.1} parent=31 // pred_check_branch
          %1858 = sbr.rel (%p1856) target = $region52
        $region51: #{tpu_custom_call.1} parent=31 // pred_region
          %s1859 = smul.u32 16, %s29
          %s1861 = ssub.s32 16384, 16384
          %1862 = vsyncadd %s1835, %s1861
          %s1863 = smul.addr %s1859, 8
          %s1864 = smul.addr %s1863, 128
          %s1865 = scalar_lea.hbm %s4, %s1864
          %s1866 = sshll.u32 %s1838, 4
          %s1867 = int_to_ptr.vmem [resolvable:$true] %s1866
          %1872 = dma.vmem_to_hbm [thread:$0]  %s1867, 16384, %s1865, %s1835, 1024, 1024, 64
        $region52: #{tpu_custom_call.1} parent=31 // pred_fallthru
          _
      $region32: #{tpu_custom_call.1} parent=5 // pred_fallthru
        _
      %p1873 = scmp.le.s32.totalorder 2, %s24
      // Predicated region
      $region53: #{tpu_custom_call.1} parent=5 // pred_check
        %p1874 = pneg %p1873
      $region54: #{tpu_custom_call.1} parent=5 // pred_check_branch
        %1876 = sbr.rel (%p1874) target = $region56
      $region55: #{tpu_custom_call.1} parent=5 // pred_region
        %s1877 = ssub.s32 %s24, 2
        // Predicated region
        $region57: #{tpu_custom_call.1} parent=55 // pred_check
          %p1878 = pneg %p126
        $region58: #{tpu_custom_call.1} parent=55 // pred_check_branch
          %1880 = sbr.rel (%p1878) target = $region60
        $region59: #{tpu_custom_call.1} parent=55 // pred_region
          %s1881 = sand.u32 %s111, 1
          %s1882 = scalar_lea.sflag [#allocation4], %s1881
          %s1883 = sand.u32 %s111, 1
          %s1884 = smul.addr %s1883, 1024
          %s1885 = scalar_lea.vmem [#allocation9], %s1884
          %1886 = dma.done %s1882, 16384
        $region60: #{tpu_custom_call.1} parent=55 // pred_fallthru
          _
        // Predicated region
        $region61: #{tpu_custom_call.1} parent=55 // pred_check
          %p1887 = pneg %p152
        $region62: #{tpu_custom_call.1} parent=55 // pred_check_branch
          %1889 = sbr.rel (%p1887) target = $region64
        $region63: #{tpu_custom_call.1} parent=55 // pred_region
          %s1890 = sand.u32 %s137, 1
          %s1891 = scalar_lea.sflag [#allocation11], %s1890
          %s1892 = sand.u32 %s137, 1
          %s1893 = smul.addr %s1892, 1024
          %s1894 = scalar_lea.vmem [#allocation10], %s1893
          %1895 = dma.done %s1891, 16384
        $region64: #{tpu_custom_call.1} parent=55 // pred_fallthru
          _
      $region56: #{tpu_custom_call.1} parent=5 // pred_fallthru
        _
    $region6: #{tpu_custom_call.1} parent=1 // loop_footer
      %s28 = sadd.s32 1, %s24
    $region7: #{tpu_custom_call.1} parent=1 // loop_footer_branch
      %23 = sbr.rel target = $region3
    $region8: #{tpu_custom_call.1} parent=1 // loop_exit
      _
    %1896 = vsyncpa [#allocation3], 1
    %s1897 = scalar_lea.sflag [#allocation3], 1
    %1898 = vsyncpa %s1897, 1
    %1899 = vsyncpa [#allocation8], 1
    %s1900 = scalar_lea.sflag [#allocation8], 1
    %1901 = vsyncpa %s1900, 1
    %1902 = vsyncpa [#allocation4], 1
    %s1903 = scalar_lea.sflag [#allocation4], 1
    %1904 = vsyncpa %s1903, 1
    %1905 = vsyncpa [#allocation11], 1
    %s1906 = scalar_lea.sflag [#allocation11], 1
    %1907 = vsyncpa %s1906, 1
    %1908 = vsyncpa [#allocation5], 1
    %s1909 = scalar_lea.sflag [#allocation5], 1
    %1910 = vsyncpa %s1909, 1

</llo_original>
